<compile_context>
chip_gen: v7x
topology: tpu7x:2x2x1
jax: 0.10.0
libtpu: 0.0.40
codegen_flags: <defaults>
</compile_context>

<pallas_src>
import jax
import jax.numpy as jnp
from jax import lax
from jax.experimental import pallas as pl
from jax.experimental.pallas import tpu as pltpu


LANE_TILE = 2048             # conv GEMM lane tile (batch*spatial columns / step)
FC_ROW_TILE = 256            # FC batch rows per grid step
FC_OUT_PAD = 128             # fc3 output padded to a full lane width
VMEM_LIMIT = 32 * 1024 * 1024  # explicit scoped-VMEM limit (safe on v5e/v6e/v7x)


# ----------------------------- Pallas kernels ------------------------------ #

def _conv_pool_kernel(p00_ref, p01_ref, p10_ref, p11_ref, w_ref, b_ref, o_ref):
    """Fused conv (as GEMM) + bias + ReLU + 2x2/2 max-pool over one lane tile.

    p??_ref: (K, L) bf16 im2col patches for pool-window offset (r, s);
             L lanes are batch-major / pooled-spatial-minor (CNHW raster).
    w_ref:   (Cout, K) bf16 conv weight; b_ref: (Cout, 1) f32 bias.
    o_ref:   (Cout, L) f32 pooled activation tile (lane-dense store).
    """
    w = w_ref[...]
    m = jnp.dot(w, p00_ref[...], preferred_element_type=jnp.float32)
    m = jnp.maximum(m, jnp.dot(w, p01_ref[...], preferred_element_type=jnp.float32))
    m = jnp.maximum(m, jnp.dot(w, p10_ref[...], preferred_element_type=jnp.float32))
    m = jnp.maximum(m, jnp.dot(w, p11_ref[...], preferred_element_type=jnp.float32))
    # max-pool == elementwise max over the 4 window offsets (commutes with the
    # monotone bias-add + ReLU epilogue).
    o_ref[...] = jnp.maximum(m + b_ref[...], 0.0)


def _fc_stack_kernel(x_ref, w1_ref, b1_ref, w2_ref, b2_ref, w3_ref, b3_ref, o_ref):
    """fc1 + ReLU + fc2 + ReLU + fc3 fused; intermediates never leave VMEM."""
    h = jnp.dot(x_ref[...], w1_ref[...], preferred_element_type=jnp.float32) + b1_ref[...]
    h = jnp.maximum(h, 0.0)
    h = jnp.dot(h, w2_ref[...], preferred_element_type=jnp.float32) + b2_ref[...]
    h = jnp.maximum(h, 0.0)
    o_ref[...] = jnp.dot(h, w3_ref[...], preferred_element_type=jnp.float32) + b3_ref[...]


# ------------------------------ layer wrappers ------------------------------ #

def _pool_offset_patches(x_cnhw, kh, kw, pad):
    """Stride-2 im2col, one patches call per 2x2 pool-window offset.

    x_cnhw: (C, N, H, W). Returns four (K, N*Hp*Wp) arrays (K = C*kh*kw, columns
    batch-major then pooled raster order) plus (Hp, Wp). The inflated patch
    tensor is written to HBM exactly once (no stride-1 im2col + strided-slice
    pass), and in the input dtype (bf16 here).
    """
    if pad:
        x_cnhw = jnp.pad(x_cnhw, ((0, 0), (0, 0), (pad, pad), (pad, pad)))
    c, n, h, w = x_cnhw.shape
    hp, wp = (h - kh + 1) // 2, (w - kw + 1) // 2
    dn = ("CNHW", "OIHW", "CNHW")     # feature (K) axis leading -> no transpose
    offs = []
    for r in (0, 1):
        for s in (0, 1):
            p = lax.conv_general_dilated_patches(
                x_cnhw[:, :, r:, s:], filter_shape=(kh, kw),
                window_strides=(2, 2), padding="VALID",
                dimension_numbers=dn)                      # (K, N, Hp, Wp)
            assert p.shape == (c * kh * kw, n, hp, wp), p.shape
            offs.append(p.reshape(p.shape[0], n * hp * wp))  # free reshape
    return offs, (hp, wp)


def conv_relu_pool(x_cnhw, w_mat, b_col, *, kh, kw, pad, lane_tile=LANE_TILE):
    """Conv2d(kh,kw,stride1) + bias + ReLU + MaxPool2d(2,2) in one pallas_call.

    x_cnhw: (Cin, N, H, W); w_mat: (Cout, Cin*kh*kw) bf16; b_col: (Cout, 1) f32.
    Returns (Cout, N, Hp, Wp) f32 in "CNHW" layout (next stage needs no transpose).
    """
    offs, (hp, wp) = _pool_offset_patches(x_cnhw.astype(jnp.bfloat16), kh, kw, pad)
    k, l = offs[0].shape
    n = x_cnhw.shape[1]
    cout = w_mat.shape[0]

    lt = l if l <= lane_tile else lane_tile        # full dim or multiple of 128
    grid = (pl.cdiv(l, lt),)

    p_spec = pl.BlockSpec((k, lt), lambda i: (0, i))
    w_spec = pl.BlockSpec((cout, k), lambda i: (0, 0))   # resident across steps
    b_spec = pl.BlockSpec((cout, 1), lambda i: (0, 0))
    o_spec = pl.BlockSpec((cout, lt), lambda i: (0, i))

    out = pl.pallas_call(
        _conv_pool_kernel,
        grid=grid,
        in_specs=[p_spec, p_spec, p_spec, p_spec, w_spec, b_spec],
        out_specs=o_spec,
        out_shape=jax.ShapeDtypeStruct((cout, l), jnp.float32),
        compiler_params=pltpu.CompilerParams(
            dimension_semantics=("parallel",),
            vmem_limit_bytes=VMEM_LIMIT),
    )(offs[0], offs[1], offs[2], offs[3], w_mat, b_col)
    return out.reshape(cout, n, hp, wp)            # free reshape; CNHW layout


def fc_stack(x, w1t, b1, w2t, b2, w3t, b3, *, row_tile=FC_ROW_TILE):
    """Three fused FC layers, gridded over batch tiles with resident weights."""
    n, d_in = x.shape
    d_out = w3t.shape[1]                           # padded to FC_OUT_PAD lanes
    tm = n if n <= row_tile else row_tile
    grid = (pl.cdiv(n, tm),)

    def resident(a):
        return pl.BlockSpec(a.shape, lambda i: (0, 0))

    return pl.pallas_call(
        _fc_stack_kernel,
        grid=grid,
        in_specs=[pl.BlockSpec((tm, d_in), lambda i: (i, 0)),
                  resident(w1t), resident(b1),
                  resident(w2t), resident(b2),
                  resident(w3t), resident(b3)],
        out_specs=pl.BlockSpec((tm, d_out), lambda i: (i, 0)),
        out_shape=jax.ShapeDtypeStruct((n, d_out), jnp.float32),
        compiler_params=pltpu.CompilerParams(
            dimension_semantics=("parallel",),
            vmem_limit_bytes=VMEM_LIMIT),
    )(x, w1t, b1, w2t, b2, w3t, b3)


# ------------------------------- forward pass ------------------------------ #

def prepare_params(params, num_classes=10):
    """Fold all layout transforms into the parameters once, outside the jitted
    forward: conv weights as bf16 (Cout, K) GEMM matrices, FC weights transposed,
    fc3 zero-padded to FC_OUT_PAD output lanes (sliced back in lenet_forward)."""
    (w1, b1, w2, b2, fw1, fb1, fw2, fb2, fw3, fb3) = params
    fw3p = jnp.zeros((fw3.shape[1], FC_OUT_PAD), jnp.float32).at[:, :num_classes].set(fw3.T)
    fb3p = jnp.zeros((1, FC_OUT_PAD), jnp.float32).at[:, :num_classes].set(fb3)
    return (
        w1.reshape(w1.shape[0], -1).astype(jnp.bfloat16), b1.reshape(-1, 1),   # (6,25),(6,1)
        w2.reshape(w2.shape[0], -1).astype(jnp.bfloat16), b2.reshape(-1, 1),   # (16,150),(16,1)
        fw1.T, fb1.reshape(1, -1),                                             # (400,120),(1,120)
        fw2.T, fb2.reshape(1, -1),                                             # (120,84),(1,84)
        fw3p, fb3p,                                                            # (84,128),(1,128)
    )


def lenet_forward(x_nchw, kparams, num_classes=10):
    (w1m, b1c, w2m, b2c, fw1t, fb1r, fw2t, fb2r, fw3t, fb3r) = kparams
    n = x_nchw.shape[0]
    x_cnhw = jnp.transpose(x_nchw, (1, 0, 2, 3))                       # tiny
    a1 = conv_relu_pool(x_cnhw, w1m, b1c, kh=5, kw=5, pad=2)           # (6, N, 14, 14)
    a2 = conv_relu_pool(a1, w2m, b2c, kh=5, kw=5, pad=0)               # (16, N, 5, 5)
    flat = jnp.transpose(a2, (1, 0, 2, 3)).reshape(n, 16 * 5 * 5)      # == torch.flatten(x, 1)
    logits = fc_stack(flat, fw1t, fb1r, fw2t, fb2r, fw3t, fb3r)        # (N, 128)
    return logits[:, :num_classes]


# --------------------------- parameter construction ------------------------ #

def init_params(key, num_classes=10):
    ks = jax.random.split(key, 10)

    def uni(k, shape, fan_in, fan_out):
        bound = (6.0 / (fan_in + fan_out)) ** 0.5
        return jax.random.uniform(k, shape, jnp.float32, -bound, bound)

    w1 = uni(ks[0], (6, 1, 5, 5), 1 * 25, 6 * 25)
    b1 = uni(ks[1], (6,), 25, 25) * 0.1
    w2 = uni(ks[2], (16, 6, 5, 5), 6 * 25, 16 * 25)
    b2 = uni(ks[3], (16,), 150, 150) * 0.1
    fw1 = uni(ks[4], (120, 400), 400, 120)
    fb1 = uni(ks[5], (120,), 400, 120) * 0.1
    fw2 = uni(ks[6], (84, 120), 120, 84)
    fb2 = uni(ks[7], (84,), 120, 84) * 0.1
    fw3 = uni(ks[8], (num_classes, 84), 84, num_classes)
    fb3 = uni(ks[9], (num_classes,), 84, num_classes) * 0.1
    return (w1, b1, w2, b2, fw1, fb1, fw2, fb2, fw3, fb3)


# ------------------------------ pure-JAX reference ------------------------- #

def reference_forward(x, params):
    (w1, b1, w2, b2, fw1, fb1, fw2, fb2, fw3, fb3) = params
    dn = ("NCHW", "OIHW", "NCHW")
    hp = jax.lax.Precision.HIGHEST

    def pool(y):
        return lax.reduce_window(y, -jnp.inf, lax.max,
                                 (1, 1, 2, 2), (1, 1, 2, 2), "VALID")

    y = lax.conv_general_dilated(x, w1, (1, 1), ((2, 2), (2, 2)),
                                 dimension_numbers=dn, precision=hp)
    y = jnp.maximum(y + b1[None, :, None, None], 0.0)
    y = pool(y)
    y = lax.conv_general_dilated(y, w2, (1, 1), "VALID",
                                 dimension_numbers=dn, precision=hp)
    y = jnp.maximum(y + b2[None, :, None, None], 0.0)
    y = pool(y)
    y = y.reshape(y.shape[0], -1)
    y = jnp.maximum(jnp.dot(y, fw1.T, precision=hp) + fb1, 0.0)
    y = jnp.maximum(jnp.dot(y, fw2.T, precision=hp) + fb2, 0.0)
    y = jnp.dot(y, fw3.T, precision=hp) + fb3
    return y


if __name__ == "__main__":
    key = jax.random.PRNGKey(0)
    kx, kp = jax.random.split(key)

    params = init_params(kp, num_classes=10)
    kparams = prepare_params(params, num_classes=10)   # one-time layout folding
    fwd = jax.jit(lenet_forward)

    # Small batch (single grid step in every kernel), NCHW like PyTorch.
    x = jax.random.normal(kx, (2, 1, 28, 28), dtype=jnp.float32)
    out = jax.block_until_ready(fwd(x, kparams))
    ref = reference_forward(x, params)
    assert out.shape == (2, 10), out.shape
    assert jnp.all(jnp.isfinite(out))
    assert jnp.allclose(out, ref, rtol=2e-2, atol=2e-2), (out, ref)

    # Larger batch: exercises the multi-step lane-tiled conv grid (including a
    # partial last block) and the batch-tiled FC grid.
    xb = jax.random.normal(kx, (16, 1, 28, 28), dtype=jnp.float32)
    outb = jax.block_until_ready(fwd(xb, kparams))
    refb = reference_forward(xb, params)
    assert outb.shape == (16, 10), outb.shape
    assert jnp.all(jnp.isfinite(outb))
    assert jnp.allclose(outb, refb, rtol=2e-2, atol=2e-2), (outb, refb)

    print("KERNEL_OK")
</pallas_src>

<mosaic_0001>
module attributes {stable_mosaic.version = 11 : i64} {
  func.func @_conv_pool_kernel(%arg0: i32, %arg1: memref<25x392xbf16, #tpu.memory_space<vmem>>, %arg2: memref<25x392xbf16, #tpu.memory_space<vmem>>, %arg3: memref<25x392xbf16, #tpu.memory_space<vmem>>, %arg4: memref<25x392xbf16, #tpu.memory_space<vmem>>, %arg5: memref<6x25xbf16, #tpu.memory_space<vmem>>, %arg6: memref<6x1xf32, #tpu.memory_space<vmem>>, %arg7: memref<6x392xf32, #tpu.memory_space<vmem>>) attributes {dimension_semantics = [#tpu.dimension_semantics<parallel>], iteration_bounds = array<i64: 1>, scalar_prefetch = 0 : i64, scratch_operands = 0 : i64, tpu.core_type = #tpu.core_type<tc>, window_params = [{transform_indices = @transform_0, window_bounds = array<i64: 25, 392>}, {transform_indices = @transform_1, window_bounds = array<i64: 25, 392>}, {transform_indices = @transform_2, window_bounds = array<i64: 25, 392>}, {transform_indices = @transform_3, window_bounds = array<i64: 25, 392>}, {pipeline_mode = #tpu.pipeline_mode<synchronous>, transform_indices = @transform_4, window_bounds = array<i64: 6, 25>}, {pipeline_mode = #tpu.pipeline_mode<synchronous>, transform_indices = @transform_5, window_bounds = array<i64: 6, 1>}, {transform_indices = @transform_6, window_bounds = array<i64: 6, 392>}]} {
    %c0 = arith.constant 0 : index
    %c0_0 = arith.constant 0 : index
    %0 = vector.load %arg5[%c0, %c0_0] : memref<6x25xbf16, #tpu.memory_space<vmem>>, vector<6x25xbf16>
    %c0_1 = arith.constant 0 : index
    %c0_2 = arith.constant 0 : index
    %1 = vector.load %arg1[%c0_1, %c0_2] : memref<25x392xbf16, #tpu.memory_space<vmem>>, vector<25x392xbf16>
    %cst = arith.constant dense<0.000000e+00> : vector<6x392xf32>
    %2 = tpu.matmul %0, %1, %cst {dimension_numbers = #tpu.dot_dimension_numbers<[1], [0], [0], [1], [0, 0, 1, 1], [], []>} : vector<6x25xbf16>, vector<25x392xbf16>, vector<6x392xf32> -> vector<6x392xf32>
    %c0_3 = arith.constant 0 : index
    %c0_4 = arith.constant 0 : index
    %3 = vector.load %arg2[%c0_3, %c0_4] : memref<25x392xbf16, #tpu.memory_space<vmem>>, vector<25x392xbf16>
    %cst_5 = arith.constant dense<0.000000e+00> : vector<6x392xf32>
    %4 = tpu.matmul %0, %3, %cst_5 {dimension_numbers = #tpu.dot_dimension_numbers<[1], [0], [0], [1], [0, 0, 1, 1], [], []>} : vector<6x25xbf16>, vector<25x392xbf16>, vector<6x392xf32> -> vector<6x392xf32>
    %5 = arith.maximumf %2, %4 : vector<6x392xf32>
    %c0_6 = arith.constant 0 : index
    %c0_7 = arith.constant 0 : index
    %6 = vector.load %arg3[%c0_6, %c0_7] : memref<25x392xbf16, #tpu.memory_space<vmem>>, vector<25x392xbf16>
    %cst_8 = arith.constant dense<0.000000e+00> : vector<6x392xf32>
    %7 = tpu.matmul %0, %6, %cst_8 {dimension_numbers = #tpu.dot_dimension_numbers<[1], [0], [0], [1], [0, 0, 1, 1], [], []>} : vector<6x25xbf16>, vector<25x392xbf16>, vector<6x392xf32> -> vector<6x392xf32>
    %8 = arith.maximumf %5, %7 : vector<6x392xf32>
    %c0_9 = arith.constant 0 : index
    %c0_10 = arith.constant 0 : index
    %9 = vector.load %arg4[%c0_9, %c0_10] : memref<25x392xbf16, #tpu.memory_space<vmem>>, vector<25x392xbf16>
    %cst_11 = arith.constant dense<0.000000e+00> : vector<6x392xf32>
    %10 = tpu.matmul %0, %9, %cst_11 {dimension_numbers = #tpu.dot_dimension_numbers<[1], [0], [0], [1], [0, 0, 1, 1], [], []>} : vector<6x25xbf16>, vector<25x392xbf16>, vector<6x392xf32> -> vector<6x392xf32>
    %11 = arith.maximumf %8, %10 : vector<6x392xf32>
    %c0_12 = arith.constant 0 : index
    %c0_13 = arith.constant 0 : index
    %12 = vector.load %arg6[%c0_12, %c0_13] : memref<6x1xf32, #tpu.memory_space<vmem>>, vector<6x1xf32>
    %13 = vector.broadcast %12 : vector<6x1xf32> to vector<6x392xf32>
    %14 = arith.addf %11, %13 : vector<6x392xf32>
    %cst_14 = arith.constant 0.000000e+00 : f32
    %15 = vector.broadcast %cst_14 : f32 to vector<6x392xf32>
    %16 = arith.maximumf %14, %15 : vector<6x392xf32>
    %c0_15 = arith.constant 0 : index
    %c0_16 = arith.constant 0 : index
    %17 = vector.load %arg7[%c0_15, %c0_16] : memref<6x392xf32, #tpu.memory_space<vmem>>, vector<6x392xf32>
    tpu.vector_store %arg7[%c0_15, %c0_16], %16 {strides = array<i32>} : memref<6x392xf32, #tpu.memory_space<vmem>>, vector<6x392xf32>,
    return
  }
  func.func @transform_0(%arg0: i32) -> (i32, i32) {
    %c0_i32 = arith.constant 0 : i32
    %c0_i32_0 = arith.constant 0 : i32
    return %c0_i32, %arg0 : i32, i32
  }
  func.func @transform_1(%arg0: i32) -> (i32, i32) {
    %c0_i32 = arith.constant 0 : i32
    %c0_i32_0 = arith.constant 0 : i32
    return %c0_i32, %arg0 : i32, i32
  }
  func.func @transform_2(%arg0: i32) -> (i32, i32) {
    %c0_i32 = arith.constant 0 : i32
    %c0_i32_0 = arith.constant 0 : i32
    return %c0_i32, %arg0 : i32, i32
  }
  func.func @transform_3(%arg0: i32) -> (i32, i32) {
    %c0_i32 = arith.constant 0 : i32
    %c0_i32_0 = arith.constant 0 : i32
    return %c0_i32, %arg0 : i32, i32
  }
  func.func @transform_4(%arg0: i32) -> (i32, i32) {
    %c0_i32 = arith.constant 0 : i32
    %c0_i32_0 = arith.constant 0 : i32
    %c0_i32_1 = arith.constant 0 : i32
    return %c0_i32, %c0_i32_0 : i32, i32
  }
  func.func @transform_5(%arg0: i32) -> (i32, i32) {
    %c0_i32 = arith.constant 0 : i32
    %c0_i32_0 = arith.constant 0 : i32
    %c0_i32_1 = arith.constant 0 : i32
    return %c0_i32, %c0_i32_0 : i32, i32
  }
  func.func @transform_6(%arg0: i32) -> (i32, i32) {
    %c0_i32 = arith.constant 0 : i32
    %c0_i32_0 = arith.constant 0 : i32
    return %c0_i32, %arg0 : i32, i32
  }
}

module attributes {stable_mosaic.version = 11 : i64} {
  func.func @_conv_pool_kernel(%arg0: i32, %arg1: memref<150x50xbf16, #tpu.memory_space<vmem>>, %arg2: memref<150x50xbf16, #tpu.memory_space<vmem>>, %arg3: memref<150x50xbf16, #tpu.memory_space<vmem>>, %arg4: memref<150x50xbf16, #tpu.memory_space<vmem>>, %arg5: memref<16x150xbf16, #tpu.memory_space<vmem>>, %arg6: memref<16x1xf32, #tpu.memory_space<vmem>>, %arg7: memref<16x50xf32, #tpu.memory_space<vmem>>) attributes {dimension_semantics = [#tpu.dimension_semantics<parallel>], iteration_bounds = array<i64: 1>, scalar_prefetch = 0 : i64, scratch_operands = 0 : i64, tpu.core_type = #tpu.core_type<tc>, window_params = [{transform_indices = @transform_0, window_bounds = array<i64: 150, 50>}, {transform_indices = @transform_1, window_bounds = array<i64: 150, 50>}, {transform_indices = @transform_2, window_bounds = array<i64: 150, 50>}, {transform_indices = @transform_3, window_bounds = array<i64: 150, 50>}, {pipeline_mode = #tpu.pipeline_mode<synchronous>, transform_indices = @transform_4, window_bounds = array<i64: 16, 150>}, {pipeline_mode = #tpu.pipeline_mode<synchronous>, transform_indices = @transform_5, window_bounds = array<i64: 16, 1>}, {transform_indices = @transform_6, window_bounds = array<i64: 16, 50>}]} {
    %c0 = arith.constant 0 : index
    %c0_0 = arith.constant 0 : index
    %0 = vector.load %arg5[%c0, %c0_0] : memref<16x150xbf16, #tpu.memory_space<vmem>>, vector<16x150xbf16>
    %c0_1 = arith.constant 0 : index
    %c0_2 = arith.constant 0 : index
    %1 = vector.load %arg1[%c0_1, %c0_2] : memref<150x50xbf16, #tpu.memory_space<vmem>>, vector<150x50xbf16>
    %cst = arith.constant dense<0.000000e+00> : vector<16x50xf32>
    %2 = tpu.matmul %0, %1, %cst {dimension_numbers = #tpu.dot_dimension_numbers<[1], [0], [0], [1], [0, 0, 1, 1], [], []>} : vector<16x150xbf16>, vector<150x50xbf16>, vector<16x50xf32> -> vector<16x50xf32>
    %c0_3 = arith.constant 0 : index
    %c0_4 = arith.constant 0 : index
    %3 = vector.load %arg2[%c0_3, %c0_4] : memref<150x50xbf16, #tpu.memory_space<vmem>>, vector<150x50xbf16>
    %cst_5 = arith.constant dense<0.000000e+00> : vector<16x50xf32>
    %4 = tpu.matmul %0, %3, %cst_5 {dimension_numbers = #tpu.dot_dimension_numbers<[1], [0], [0], [1], [0, 0, 1, 1], [], []>} : vector<16x150xbf16>, vector<150x50xbf16>, vector<16x50xf32> -> vector<16x50xf32>
    %5 = arith.maximumf %2, %4 : vector<16x50xf32>
    %c0_6 = arith.constant 0 : index
    %c0_7 = arith.constant 0 : index
    %6 = vector.load %arg3[%c0_6, %c0_7] : memref<150x50xbf16, #tpu.memory_space<vmem>>, vector<150x50xbf16>
    %cst_8 = arith.constant dense<0.000000e+00> : vector<16x50xf32>
    %7 = tpu.matmul %0, %6, %cst_8 {dimension_numbers = #tpu.dot_dimension_numbers<[1], [0], [0], [1], [0, 0, 1, 1], [], []>} : vector<16x150xbf16>, vector<150x50xbf16>, vector<16x50xf32> -> vector<16x50xf32>
    %8 = arith.maximumf %5, %7 : vector<16x50xf32>
    %c0_9 = arith.constant 0 : index
    %c0_10 = arith.constant 0 : index
    %9 = vector.load %arg4[%c0_9, %c0_10] : memref<150x50xbf16, #tpu.memory_space<vmem>>, vector<150x50xbf16>
    %cst_11 = arith.constant dense<0.000000e+00> : vector<16x50xf32>
    %10 = tpu.matmul %0, %9, %cst_11 {dimension_numbers = #tpu.dot_dimension_numbers<[1], [0], [0], [1], [0, 0, 1, 1], [], []>} : vector<16x150xbf16>, vector<150x50xbf16>, vector<16x50xf32> -> vector<16x50xf32>
    %11 = arith.maximumf %8, %10 : vector<16x50xf32>
    %c0_12 = arith.constant 0 : index
    %c0_13 = arith.constant 0 : index
    %12 = vector.load %arg6[%c0_12, %c0_13] : memref<16x1xf32, #tpu.memory_space<vmem>>, vector<16x1xf32>
    %13 = vector.broadcast %12 : vector<16x1xf32> to vector<16x50xf32>
    %14 = arith.addf %11, %13 : vector<16x50xf32>
    %cst_14 = arith.constant 0.000000e+00 : f32
    %15 = vector.broadcast %cst_14 : f32 to vector<16x50xf32>
    %16 = arith.maximumf %14, %15 : vector<16x50xf32>
    %c0_15 = arith.constant 0 : index
    %c0_16 = arith.constant 0 : index
    %17 = vector.load %arg7[%c0_15, %c0_16] : memref<16x50xf32, #tpu.memory_space<vmem>>, vector<16x50xf32>
    tpu.vector_store %arg7[%c0_15, %c0_16], %16 {strides = array<i32>} : memref<16x50xf32, #tpu.memory_space<vmem>>, vector<16x50xf32>,
    return
  }
  func.func @transform_0(%arg0: i32) -> (i32, i32) {
    %c0_i32 = arith.constant 0 : i32
    %c0_i32_0 = arith.constant 0 : i32
    return %c0_i32, %arg0 : i32, i32
  }
  func.func @transform_1(%arg0: i32) -> (i32, i32) {
    %c0_i32 = arith.constant 0 : i32
    %c0_i32_0 = arith.constant 0 : i32
    return %c0_i32, %arg0 : i32, i32
  }
  func.func @transform_2(%arg0: i32) -> (i32, i32) {
    %c0_i32 = arith.constant 0 : i32
    %c0_i32_0 = arith.constant 0 : i32
    return %c0_i32, %arg0 : i32, i32
  }
  func.func @transform_3(%arg0: i32) -> (i32, i32) {
    %c0_i32 = arith.constant 0 : i32
    %c0_i32_0 = arith.constant 0 : i32
    return %c0_i32, %arg0 : i32, i32
  }
  func.func @transform_4(%arg0: i32) -> (i32, i32) {
    %c0_i32 = arith.constant 0 : i32
    %c0_i32_0 = arith.constant 0 : i32
    %c0_i32_1 = arith.constant 0 : i32
    return %c0_i32, %c0_i32_0 : i32, i32
  }
  func.func @transform_5(%arg0: i32) -> (i32, i32) {
    %c0_i32 = arith.constant 0 : i32
    %c0_i32_0 = arith.constant 0 : i32
    %c0_i32_1 = arith.constant 0 : i32
    return %c0_i32, %c0_i32_0 : i32, i32
  }
  func.func @transform_6(%arg0: i32) -> (i32, i32) {
    %c0_i32 = arith.constant 0 : i32
    %c0_i32_0 = arith.constant 0 : i32
    return %c0_i32, %arg0 : i32, i32
  }
}

module attributes {stable_mosaic.version = 11 : i64} {
  func.func @_fc_stack_kernel(%arg0: i32, %arg1: memref<2x400xf32, #tpu.memory_space<vmem>>, %arg2: memref<400x120xf32, #tpu.memory_space<vmem>>, %arg3: memref<1x120xf32, #tpu.memory_space<vmem>>, %arg4: memref<120x84xf32, #tpu.memory_space<vmem>>, %arg5: memref<1x84xf32, #tpu.memory_space<vmem>>, %arg6: memref<84x128xf32, #tpu.memory_space<vmem>>, %arg7: memref<1x128xf32, #tpu.memory_space<vmem>>, %arg8: memref<2x128xf32, #tpu.memory_space<vmem>>) attributes {dimension_semantics = [#tpu.dimension_semantics<parallel>], iteration_bounds = array<i64: 1>, scalar_prefetch = 0 : i64, scratch_operands = 0 : i64, tpu.core_type = #tpu.core_type<tc>, window_params = [{transform_indices = @transform_0, window_bounds = array<i64: 2, 400>}, {pipeline_mode = #tpu.pipeline_mode<synchronous>, transform_indices = @transform_1, window_bounds = array<i64: 400, 120>}, {pipeline_mode = #tpu.pipeline_mode<synchronous>, transform_indices = @transform_2, window_bounds = array<i64: 1, 120>}, {pipeline_mode = #tpu.pipeline_mode<synchronous>, transform_indices = @transform_3, window_bounds = array<i64: 120, 84>}, {pipeline_mode = #tpu.pipeline_mode<synchronous>, transform_indices = @transform_4, window_bounds = array<i64: 1, 84>}, {pipeline_mode = #tpu.pipeline_mode<synchronous>, transform_indices = @transform_5, window_bounds = array<i64: 84, 128>}, {pipeline_mode = #tpu.pipeline_mode<synchronous>, transform_indices = @transform_6, window_bounds = array<i64: 1, 128>}, {transform_indices = @transform_7, window_bounds = array<i64: 2, 128>}]} {
    %c0 = arith.constant 0 : index
    %c0_0 = arith.constant 0 : index
    %0 = vector.load %arg1[%c0, %c0_0] : memref<2x400xf32, #tpu.memory_space<vmem>>, vector<2x400xf32>
    %c0_1 = arith.constant 0 : index
    %c0_2 = arith.constant 0 : index
    %1 = vector.load %arg2[%c0_1, %c0_2] : memref<400x120xf32, #tpu.memory_space<vmem>>, vector<400x120xf32>
    %cst = arith.constant dense<0.000000e+00> : vector<2x120xf32>
    %2 = tpu.matmul %0, %1, %cst {dimension_numbers = #tpu.dot_dimension_numbers<[1], [0], [0], [1], [0, 0, 1, 1], [], []>} : vector<2x400xf32>, vector<400x120xf32>, vector<2x120xf32> -> vector<2x120xf32>
    %c0_3 = arith.constant 0 : index
    %c0_4 = arith.constant 0 : index
    %3 = vector.load %arg3[%c0_3, %c0_4] : memref<1x120xf32, #tpu.memory_space<vmem>>, vector<1x120xf32>
    %4 = vector.broadcast %3 : vector<1x120xf32> to vector<2x120xf32>
    %5 = arith.addf %2, %4 : vector<2x120xf32>
    %cst_5 = arith.constant 0.000000e+00 : f32
    %6 = vector.broadcast %cst_5 : f32 to vector<2x120xf32>
    %7 = arith.maximumf %5, %6 : vector<2x120xf32>
    %c0_6 = arith.constant 0 : index
    %c0_7 = arith.constant 0 : index
    %8 = vector.load %arg4[%c0_6, %c0_7] : memref<120x84xf32, #tpu.memory_space<vmem>>, vector<120x84xf32>
    %cst_8 = arith.constant dense<0.000000e+00> : vector<2x84xf32>
    %9 = tpu.matmul %7, %8, %cst_8 {dimension_numbers = #tpu.dot_dimension_numbers<[1], [0], [0], [1], [0, 0, 1, 1], [], []>} : vector<2x120xf32>, vector<120x84xf32>, vector<2x84xf32> -> vector<2x84xf32>
    %c0_9 = arith.constant 0 : index
    %c0_10 = arith.constant 0 : index
    %10 = vector.load %arg5[%c0_9, %c0_10] : memref<1x84xf32, #tpu.memory_space<vmem>>, vector<1x84xf32>
    %11 = vector.broadcast %10 : vector<1x84xf32> to vector<2x84xf32>
    %12 = arith.addf %9, %11 : vector<2x84xf32>
    %cst_11 = arith.constant 0.000000e+00 : f32
    %13 = vector.broadcast %cst_11 : f32 to vector<2x84xf32>
    %14 = arith.maximumf %12, %13 : vector<2x84xf32>
    %c0_12 = arith.constant 0 : index
    %c0_13 = arith.constant 0 : index
    %15 = vector.load %arg6[%c0_12, %c0_13] : memref<84x128xf32, #tpu.memory_space<vmem>>, vector<84x128xf32>
    %cst_14 = arith.constant dense<0.000000e+00> : vector<2x128xf32>
    %16 = tpu.matmul %14, %15, %cst_14 {dimension_numbers = #tpu.dot_dimension_numbers<[1], [0], [0], [1], [0, 0, 1, 1], [], []>} : vector<2x84xf32>, vector<84x128xf32>, vector<2x128xf32> -> vector<2x128xf32>
    %c0_15 = arith.constant 0 : index
    %c0_16 = arith.constant 0 : index
    %17 = vector.load %arg7[%c0_15, %c0_16] : memref<1x128xf32, #tpu.memory_space<vmem>>, vector<1x128xf32>
    %18 = vector.broadcast %17 : vector<1x128xf32> to vector<2x128xf32>
    %19 = arith.addf %16, %18 : vector<2x128xf32>
    %c0_17 = arith.constant 0 : index
    %c0_18 = arith.constant 0 : index
    %20 = vector.load %arg8[%c0_17, %c0_18] : memref<2x128xf32, #tpu.memory_space<vmem>>, vector<2x128xf32>
    tpu.vector_store %arg8[%c0_17, %c0_18], %19 {strides = array<i32>} : memref<2x128xf32, #tpu.memory_space<vmem>>, vector<2x128xf32>,
    return
  }
  func.func @transform_0(%arg0: i32) -> (i32, i32) {
    %c0_i32 = arith.constant 0 : i32
    %c0_i32_0 = arith.constant 0 : i32
    return %arg0, %c0_i32 : i32, i32
  }
  func.func @transform_1(%arg0: i32) -> (i32, i32) {
    %c0_i32 = arith.constant 0 : i32
    %c0_i32_0 = arith.constant 0 : i32
    %c0_i32_1 = arith.constant 0 : i32
    return %c0_i32, %c0_i32_0 : i32, i32
  }
  func.func @transform_2(%arg0: i32) -> (i32, i32) {
    %c0_i32 = arith.constant 0 : i32
    %c0_i32_0 = arith.constant 0 : i32
    %c0_i32_1 = arith.constant 0 : i32
    return %c0_i32, %c0_i32_0 : i32, i32
  }
  func.func @transform_3(%arg0: i32) -> (i32, i32) {
    %c0_i32 = arith.constant 0 : i32
    %c0_i32_0 = arith.constant 0 : i32
    %c0_i32_1 = arith.constant 0 : i32
    return %c0_i32, %c0_i32_0 : i32, i32
  }
  func.func @transform_4(%arg0: i32) -> (i32, i32) {
    %c0_i32 = arith.constant 0 : i32
    %c0_i32_0 = arith.constant 0 : i32
    %c0_i32_1 = arith.constant 0 : i32
    return %c0_i32, %c0_i32_0 : i32, i32
  }
  func.func @transform_5(%arg0: i32) -> (i32, i32) {
    %c0_i32 = arith.constant 0 : i32
    %c0_i32_0 = arith.constant 0 : i32
    %c0_i32_1 = arith.constant 0 : i32
    return %c0_i32, %c0_i32_0 : i32, i32
  }
  func.func @transform_6(%arg0: i32) -> (i32, i32) {
    %c0_i32 = arith.constant 0 : i32
    %c0_i32_0 = arith.constant 0 : i32
    %c0_i32_1 = arith.constant 0 : i32
    return %c0_i32, %c0_i32_0 : i32, i32
  }
  func.func @transform_7(%arg0: i32) -> (i32, i32) {
    %c0_i32 = arith.constant 0 : i32
    %c0_i32_0 = arith.constant 0 : i32
    return %arg0, %c0_i32 : i32, i32
  }
}

</mosaic_0001>

<llo_original>
// kernel: lenet_forward.3
$region0: #{lenet_forward.3}
  #allocation0 [shape = 'u32[]', space=smem, size = 0x4, offset = 0x4, fixed_abs, tag = 'smem constant byte address 0x4 - core index']
  #allocation1 [shape = 'u32[144,128]{1,0:T(1,128)}', space=vmem, size = 0x12000, scoped, tag = 'internal scratch']
  %s0 = inlined_call_operand.vmem [shape: bf16[25,392], index: 0, kind: input, shape index: {}]
  %s1 = inlined_call_operand.vmem [shape: bf16[25,392], index: 1, kind: input, shape index: {}]
  %s2 = inlined_call_operand.vmem [shape: bf16[25,392], index: 2, kind: input, shape index: {}]
  %s3 = inlined_call_operand.vmem [shape: bf16[25,392], index: 3, kind: input, shape index: {}]
  %s4 = inlined_call_operand.vmem [shape: bf16[6,25], index: 4, kind: input, shape index: {}]
  %s5 = inlined_call_operand.vmem [shape: f32[6,1], index: 5, kind: input, shape index: {}]
  %s6 = inlined_call_operand.vmem [shape: f32[6,392], index: 6, kind: output, shape index: {}]
  %s7 = sld [smem:[#allocation0]]
  $region34: #{lenet_forward.3} parent=0
    _
  %s9 = ssub.s32 1, %s7
  %s10 = scalar_select 0, %s9, %s7
  // Predicated region
  $region2: #{lenet_forward.3} parent=0 // pred_check
    _
  $region3: #{lenet_forward.3} parent=0 // pred_check_branch
    %12 = sbr.rel (0) target = $region5
  $region4: #{lenet_forward.3} parent=0 // pred_region
    _
  $region5: #{lenet_forward.3} parent=0 // pred_fallthru
    _
  // Predicated region
  $region6: #{lenet_forward.3} parent=0 // pred_check
    _
  $region7: #{lenet_forward.3} parent=0 // pred_check_branch
    %14 = sbr.rel (0) target = $region9
  $region8: #{lenet_forward.3} parent=0 // pred_region
    _
  $region9: #{lenet_forward.3} parent=0 // pred_fallthru
    _
  // Predicated region
  $region10: #{lenet_forward.3} parent=0 // pred_check
    _
  $region11: #{lenet_forward.3} parent=0 // pred_check_branch
    %16 = sbr.rel (0) target = $region13
  $region12: #{lenet_forward.3} parent=0 // pred_region
    _
  $region13: #{lenet_forward.3} parent=0 // pred_fallthru
    _
  // Predicated region
  $region14: #{lenet_forward.3} parent=0 // pred_check
    _
  $region15: #{lenet_forward.3} parent=0 // pred_check_branch
    %18 = sbr.rel (0) target = $region17
  $region16: #{lenet_forward.3} parent=0 // pred_region
    _
  $region17: #{lenet_forward.3} parent=0 // pred_fallthru
    _
  // Predicated region
  $region18: #{lenet_forward.3} parent=0 // pred_check
    _
  $region19: #{lenet_forward.3} parent=0 // pred_check_branch
    %20 = sbr.rel (0) target = $region21
  $region20: #{lenet_forward.3} parent=0 // pred_region
    _
  $region21: #{lenet_forward.3} parent=0 // pred_fallthru
    _
  // Predicated region
  $region22: #{lenet_forward.3} parent=0 // pred_check
    _
  $region23: #{lenet_forward.3} parent=0 // pred_check_branch
    %22 = sbr.rel (0) target = $region25
  $region24: #{lenet_forward.3} parent=0 // pred_region
    _
  $region25: #{lenet_forward.3} parent=0 // pred_fallthru
    _
  %v24 = vld [vmem:[%s4] sm:$0x7]
  %v25 = vld [vmem:[%s0] sm:$0xff]
  %v26 = vld [vmem:[%s0 + $0x8] sm:$0xff]
  %v27 = vld [vmem:[%s0 + $0x10] sm:$0xff]
  %v28 = vld [vmem:[%s0 + $0x18] sm:$0xff]
  %v29 = vld [vmem:[%s0 + $0x20] sm:$0xff]
  %v30 = vld [vmem:[%s0 + $0x28] sm:$0xff]
  %v31 = vld [vmem:[%s0 + $0x30] sm:$0x11]
  %v32 = vld [vmem:[%s0 + $0x38] sm:$0x11]
  %v41 = vunpack.c.l.b16 %v25
  %v42 = vunpack.c.h.b16 %v25
  %v43 = vunpack.c.l.b16 %v26
  %v44 = vunpack.c.h.b16 %v26
  %v45 = vunpack.c.l.b16 %v27
  %v46 = vunpack.c.h.b16 %v27
  %v47 = vunpack.c.l.b16 %v28
  %v48 = vunpack.c.h.b16 %v28
  %v49 = vunpack.c.l.b16 %v29
  %v50 = vunpack.c.h.b16 %v29
  %v51 = vunpack.c.l.b16 %v30
  %v52 = vunpack.c.h.b16 %v30
  %v53 = vunpack.c.l.b16 %v31
  %v54 = vunpack.c.h.b16 %v31
  %v55 = vunpack.c.l.b16 %v32
  %v56 = vunpack.c.h.b16 %v32
  %v57 = vpack.c.b16 %v45, %v41
  %v58 = vpack.c.b16 %v46, %v42
  %v59 = vpack.c.b16 %v47, %v43
  %v60 = vpack.c.b16 %v48, %v44
  %v61 = vpack.c.b16 %v53, %v49
  %v62 = vpack.c.b16 %v54, %v50
  %v63 = vpack.c.b16 %v55, %v51
  %v64 = vpack.c.b16 %v56, %v52
  %vm69 = vcmask 203776
  %v71 = vsel %vm69, %v24, 0
  %vm73 = vcmask 1043456
  %vm74 = vcmask 1044480
  %v75 = vsel %vm73, 4294967295, 65535
  %v76 = vsel %vm74, %v75, 0
  %v78 = vand.u32 %v61, %v76
  %v81 = vand.u32 %v62, %v76
  %v84 = vand.u32 %v63, %v76
  %v87 = vand.u32 %v64, %v76
  %89 = vmatprep.subr.bf16.mxu0 %v58
  %90 = vmatpush1.bf16.msra.mxu0 %v57
  %91 = vmatprep.subr.bf16.mxu0 %v81
  %92 = vmatpush1.bf16.msra.mxu0 %v78
  %93 = vmatprep.subr.bf16.mxu0 0
  %94 = vmatpush1.bf16.msra.mxu0 0
  %95 = vmatprep.subr.bf16.mxu0 0
  %96 = vmatpush1.bf16.msra.mxu0 0
  %97 = vmatprep.subr.bf16.mxu0 0
  %98 = vmatpush1.bf16.msra.mxu0 0
  %99 = vmatprep.subr.bf16.mxu0 0
  %100 = vmatpush1.bf16.msra.mxu0 0
  %101 = vmatprep.subr.bf16.mxu0 0
  %102 = vmatpush1.bf16.msra.mxu0 0
  %103 = vmatprep.subr.bf16.mxu0 0
  %104 = vmatpush1.bf16.msra.mxu0 0
  %105 = vmatprep.subr.bf16.mxu0 0
  %106 = vmatpush1.bf16.msra.mxu0 0
  %107 = vmatprep.subr.bf16.mxu0 0
  %108 = vmatpush1.bf16.msra.mxu0 0
  %109 = vmatprep.subr.bf16.mxu0 0
  %110 = vmatpush1.bf16.msra.mxu0 0
  %111 = vmatprep.subr.bf16.mxu0 0
  %112 = vmatpush1.bf16.msra.mxu0 0
  %113 = vmatprep.subr.bf16.mxu0 0
  %114 = vmatpush1.bf16.msra.mxu0 0
  %115 = vmatprep.subr.bf16.mxu0 0
  %116 = vmatpush1.bf16.msra.mxu0 0
  %117 = vmatprep.subr.bf16.mxu0 0
  %118 = vmatpush1.bf16.msra.mxu0 0
  %119 = vmatprep.subr.bf16.mxu0 0
  %120 = vmatpush1.bf16.msra.mxu0 0
  %121 = vmatprep.mubr.bf16.mxu0 0
  %122 = vmatmul.mubr.bf16.gmra.mrb[0].mxu0 %v71
  %v123 = vpop.f32.mrb[0].mxu0
  %v124 = vadd.f32 0.0, %v123
  %v125 = vpop.f32.mrb[0].mxu0
  %v126 = vadd.f32 0.0, %v125
  %v127 = vpop.f32.mrb[0].mxu0
  %v128 = vpop.f32.mrb[0].mxu0
  %129 = vdwg.mxu0
  %130 = vmatprep.subr.bf16.mxu0 %v60
  %131 = vmatpush1.bf16.msra.mxu0 %v59
  %132 = vmatprep.subr.bf16.mxu0 %v87
  %133 = vmatpush1.bf16.msra.mxu0 %v84
  %134 = vmatprep.subr.bf16.mxu0 0
  %135 = vmatpush1.bf16.msra.mxu0 0
  %136 = vmatprep.subr.bf16.mxu0 0
  %137 = vmatpush1.bf16.msra.mxu0 0
  %138 = vmatprep.subr.bf16.mxu0 0
  %139 = vmatpush1.bf16.msra.mxu0 0
  %140 = vmatprep.subr.bf16.mxu0 0
  %141 = vmatpush1.bf16.msra.mxu0 0
  %142 = vmatprep.subr.bf16.mxu0 0
  %143 = vmatpush1.bf16.msra.mxu0 0
  %144 = vmatprep.subr.bf16.mxu0 0
  %145 = vmatpush1.bf16.msra.mxu0 0
  %146 = vmatprep.subr.bf16.mxu0 0
  %147 = vmatpush1.bf16.msra.mxu0 0
  %148 = vmatprep.subr.bf16.mxu0 0
  %149 = vmatpush1.bf16.msra.mxu0 0
  %150 = vmatprep.subr.bf16.mxu0 0
  %151 = vmatpush1.bf16.msra.mxu0 0
  %152 = vmatprep.subr.bf16.mxu0 0
  %153 = vmatpush1.bf16.msra.mxu0 0
  %154 = vmatprep.subr.bf16.mxu0 0
  %155 = vmatpush1.bf16.msra.mxu0 0
  %156 = vmatprep.subr.bf16.mxu0 0
  %157 = vmatpush1.bf16.msra.mxu0 0
  %158 = vmatprep.subr.bf16.mxu0 0
  %159 = vmatpush1.bf16.msra.mxu0 0
  %160 = vmatprep.subr.bf16.mxu0 0
  %161 = vmatpush1.bf16.msra.mxu0 0
  %162 = vmatprep.mubr.bf16.mxu0 0
  %163 = vmatmul.mubr.bf16.gmra.mrb[0].mxu0 %v71
  %v164 = vpop.f32.mrb[0].mxu0
  %v165 = vadd.f32 0.0, %v164
  %v166 = vpop.f32.mrb[0].mxu0
  %v167 = vadd.f32 0.0, %v166
  %v168 = vpop.f32.mrb[0].mxu0
  %v169 = vpop.f32.mrb[0].mxu0
  %170 = vdwg.mxu0
  %v171 = vld [vmem:[%s1] sm:$0xff]
  %v172 = vld [vmem:[%s1 + $0x8] sm:$0xff]
  %v173 = vld [vmem:[%s1 + $0x10] sm:$0xff]
  %v174 = vld [vmem:[%s1 + $0x18] sm:$0xff]
  %v175 = vld [vmem:[%s1 + $0x20] sm:$0xff]
  %v176 = vld [vmem:[%s1 + $0x28] sm:$0xff]
  %v177 = vld [vmem:[%s1 + $0x30] sm:$0x11]
  %v178 = vld [vmem:[%s1 + $0x38] sm:$0x11]
  %v187 = vunpack.c.l.b16 %v171
  %v188 = vunpack.c.h.b16 %v171
  %v189 = vunpack.c.l.b16 %v172
  %v190 = vunpack.c.h.b16 %v172
  %v191 = vunpack.c.l.b16 %v173
  %v192 = vunpack.c.h.b16 %v173
  %v193 = vunpack.c.l.b16 %v174
  %v194 = vunpack.c.h.b16 %v174
  %v195 = vunpack.c.l.b16 %v175
  %v196 = vunpack.c.h.b16 %v175
  %v197 = vunpack.c.l.b16 %v176
  %v198 = vunpack.c.h.b16 %v176
  %v199 = vunpack.c.l.b16 %v177
  %v200 = vunpack.c.h.b16 %v177
  %v201 = vunpack.c.l.b16 %v178
  %v202 = vunpack.c.h.b16 %v178
  %v203 = vpack.c.b16 %v191, %v187
  %v204 = vpack.c.b16 %v192, %v188
  %v205 = vpack.c.b16 %v193, %v189
  %v206 = vpack.c.b16 %v194, %v190
  %v207 = vpack.c.b16 %v199, %v195
  %v208 = vpack.c.b16 %v200, %v196
  %v209 = vpack.c.b16 %v201, %v197
  %v210 = vpack.c.b16 %v202, %v198
  %v216 = vand.u32 %v207, %v76
  %v219 = vand.u32 %v208, %v76
  %v222 = vand.u32 %v209, %v76
  %v225 = vand.u32 %v210, %v76
  %227 = vmatprep.subr.bf16.mxu0 %v204
  %228 = vmatpush1.bf16.msra.mxu0 %v203
  %229 = vmatprep.subr.bf16.mxu0 %v219
  %230 = vmatpush1.bf16.msra.mxu0 %v216
  %231 = vmatprep.subr.bf16.mxu0 0
  %232 = vmatpush1.bf16.msra.mxu0 0
  %233 = vmatprep.subr.bf16.mxu0 0
  %234 = vmatpush1.bf16.msra.mxu0 0
  %235 = vmatprep.subr.bf16.mxu0 0
  %236 = vmatpush1.bf16.msra.mxu0 0
  %237 = vmatprep.subr.bf16.mxu0 0
  %238 = vmatpush1.bf16.msra.mxu0 0
  %239 = vmatprep.subr.bf16.mxu0 0
  %240 = vmatpush1.bf16.msra.mxu0 0
  %241 = vmatprep.subr.bf16.mxu0 0
  %242 = vmatpush1.bf16.msra.mxu0 0
  %243 = vmatprep.subr.bf16.mxu0 0
  %244 = vmatpush1.bf16.msra.mxu0 0
  %245 = vmatprep.subr.bf16.mxu0 0
  %246 = vmatpush1.bf16.msra.mxu0 0
  %247 = vmatprep.subr.bf16.mxu0 0
  %248 = vmatpush1.bf16.msra.mxu0 0
  %249 = vmatprep.subr.bf16.mxu0 0
  %250 = vmatpush1.bf16.msra.mxu0 0
  %251 = vmatprep.subr.bf16.mxu0 0
  %252 = vmatpush1.bf16.msra.mxu0 0
  %253 = vmatprep.subr.bf16.mxu0 0
  %254 = vmatpush1.bf16.msra.mxu0 0
  %255 = vmatprep.subr.bf16.mxu0 0
  %256 = vmatpush1.bf16.msra.mxu0 0
  %257 = vmatprep.subr.bf16.mxu0 0
  %258 = vmatpush1.bf16.msra.mxu0 0
  %259 = vmatprep.mubr.bf16.mxu0 0
  %260 = vmatmul.mubr.bf16.gmra.mrb[0].mxu0 %v71
  %v261 = vpop.f32.mrb[0].mxu0
  %v262 = vadd.f32 0.0, %v261
  %v263 = vpop.f32.mrb[0].mxu0
  %v264 = vadd.f32 0.0, %v263
  %v265 = vpop.f32.mrb[0].mxu0
  %v266 = vpop.f32.mrb[0].mxu0
  %267 = vdwg.mxu0
  %268 = vmatprep.subr.bf16.mxu0 %v206
  %269 = vmatpush1.bf16.msra.mxu0 %v205
  %270 = vmatprep.subr.bf16.mxu0 %v225
  %271 = vmatpush1.bf16.msra.mxu0 %v222
  %272 = vmatprep.subr.bf16.mxu0 0
  %273 = vmatpush1.bf16.msra.mxu0 0
  %274 = vmatprep.subr.bf16.mxu0 0
  %275 = vmatpush1.bf16.msra.mxu0 0
  %276 = vmatprep.subr.bf16.mxu0 0
  %277 = vmatpush1.bf16.msra.mxu0 0
  %278 = vmatprep.subr.bf16.mxu0 0
  %279 = vmatpush1.bf16.msra.mxu0 0
  %280 = vmatprep.subr.bf16.mxu0 0
  %281 = vmatpush1.bf16.msra.mxu0 0
  %282 = vmatprep.subr.bf16.mxu0 0
  %283 = vmatpush1.bf16.msra.mxu0 0
  %284 = vmatprep.subr.bf16.mxu0 0
  %285 = vmatpush1.bf16.msra.mxu0 0
  %286 = vmatprep.subr.bf16.mxu0 0
  %287 = vmatpush1.bf16.msra.mxu0 0
  %288 = vmatprep.subr.bf16.mxu0 0
  %289 = vmatpush1.bf16.msra.mxu0 0
  %290 = vmatprep.subr.bf16.mxu0 0
  %291 = vmatpush1.bf16.msra.mxu0 0
  %292 = vmatprep.subr.bf16.mxu0 0
  %293 = vmatpush1.bf16.msra.mxu0 0
  %294 = vmatprep.subr.bf16.mxu0 0
  %295 = vmatpush1.bf16.msra.mxu0 0
  %296 = vmatprep.subr.bf16.mxu0 0
  %297 = vmatpush1.bf16.msra.mxu0 0
  %298 = vmatprep.subr.bf16.mxu0 0
  %299 = vmatpush1.bf16.msra.mxu0 0
  %300 = vmatprep.mubr.bf16.mxu0 0
  %301 = vmatmul.mubr.bf16.gmra.mrb[0].mxu0 %v71
  %v302 = vpop.f32.mrb[0].mxu0
  %v303 = vadd.f32 0.0, %v302
  %v304 = vpop.f32.mrb[0].mxu0
  %v305 = vadd.f32 0.0, %v304
  %v306 = vpop.f32.mrb[0].mxu0
  %v307 = vpop.f32.mrb[0].mxu0
  %308 = vdwg.mxu0
  %v309 = vmax.f32 %v124, %v262
  %v310 = vmax.f32 %v126, %v264
  %v311 = vmax.f32 %v165, %v303
  %v312 = vmax.f32 %v167, %v305
  %v313 = vld [vmem:[%s2] sm:$0xff]
  %v314 = vld [vmem:[%s2 + $0x8] sm:$0xff]
  %v315 = vld [vmem:[%s2 + $0x10] sm:$0xff]
  %v316 = vld [vmem:[%s2 + $0x18] sm:$0xff]
  %v317 = vld [vmem:[%s2 + $0x20] sm:$0xff]
  %v318 = vld [vmem:[%s2 + $0x28] sm:$0xff]
  %v319 = vld [vmem:[%s2 + $0x30] sm:$0x11]
  %v320 = vld [vmem:[%s2 + $0x38] sm:$0x11]
  %v329 = vunpack.c.l.b16 %v313
  %v330 = vunpack.c.h.b16 %v313
  %v331 = vunpack.c.l.b16 %v314
  %v332 = vunpack.c.h.b16 %v314
  %v333 = vunpack.c.l.b16 %v315
  %v334 = vunpack.c.h.b16 %v315
  %v335 = vunpack.c.l.b16 %v316
  %v336 = vunpack.c.h.b16 %v316
  %v337 = vunpack.c.l.b16 %v317
  %v338 = vunpack.c.h.b16 %v317
  %v339 = vunpack.c.l.b16 %v318
  %v340 = vunpack.c.h.b16 %v318
  %v341 = vunpack.c.l.b16 %v319
  %v342 = vunpack.c.h.b16 %v319
  %v343 = vunpack.c.l.b16 %v320
  %v344 = vunpack.c.h.b16 %v320
  %v345 = vpack.c.b16 %v333, %v329
  %v346 = vpack.c.b16 %v334, %v330
  %v347 = vpack.c.b16 %v335, %v331
  %v348 = vpack.c.b16 %v336, %v332
  %v349 = vpack.c.b16 %v341, %v337
  %v350 = vpack.c.b16 %v342, %v338
  %v351 = vpack.c.b16 %v343, %v339
  %v352 = vpack.c.b16 %v344, %v340
  %v358 = vand.u32 %v349, %v76
  %v361 = vand.u32 %v350, %v76
  %v364 = vand.u32 %v351, %v76
  %v367 = vand.u32 %v352, %v76
  %369 = vmatprep.subr.bf16.mxu0 %v346
  %370 = vmatpush1.bf16.msra.mxu0 %v345
  %371 = vmatprep.subr.bf16.mxu0 %v361
  %372 = vmatpush1.bf16.msra.mxu0 %v358
  %373 = vmatprep.subr.bf16.mxu0 0
  %374 = vmatpush1.bf16.msra.mxu0 0
  %375 = vmatprep.subr.bf16.mxu0 0
  %376 = vmatpush1.bf16.msra.mxu0 0
  %377 = vmatprep.subr.bf16.mxu0 0
  %378 = vmatpush1.bf16.msra.mxu0 0
  %379 = vmatprep.subr.bf16.mxu0 0
  %380 = vmatpush1.bf16.msra.mxu0 0
  %381 = vmatprep.subr.bf16.mxu0 0
  %382 = vmatpush1.bf16.msra.mxu0 0
  %383 = vmatprep.subr.bf16.mxu0 0
  %384 = vmatpush1.bf16.msra.mxu0 0
  %385 = vmatprep.subr.bf16.mxu0 0
  %386 = vmatpush1.bf16.msra.mxu0 0
  %387 = vmatprep.subr.bf16.mxu0 0
  %388 = vmatpush1.bf16.msra.mxu0 0
  %389 = vmatprep.subr.bf16.mxu0 0
  %390 = vmatpush1.bf16.msra.mxu0 0
  %391 = vmatprep.subr.bf16.mxu0 0
  %392 = vmatpush1.bf16.msra.mxu0 0
  %393 = vmatprep.subr.bf16.mxu0 0
  %394 = vmatpush1.bf16.msra.mxu0 0
  %395 = vmatprep.subr.bf16.mxu0 0
  %396 = vmatpush1.bf16.msra.mxu0 0
  %397 = vmatprep.subr.bf16.mxu0 0
  %398 = vmatpush1.bf16.msra.mxu0 0
  %399 = vmatprep.subr.bf16.mxu0 0
  %400 = vmatpush1.bf16.msra.mxu0 0
  %401 = vmatprep.mubr.bf16.mxu0 0
  %402 = vmatmul.mubr.bf16.gmra.mrb[0].mxu0 %v71
  %v403 = vpop.f32.mrb[0].mxu0
  %v404 = vadd.f32 0.0, %v403
  %v405 = vpop.f32.mrb[0].mxu0
  %v406 = vadd.f32 0.0, %v405
  %v407 = vpop.f32.mrb[0].mxu0
  %v408 = vpop.f32.mrb[0].mxu0
  %409 = vdwg.mxu0
  %410 = vmatprep.subr.bf16.mxu0 %v348
  %411 = vmatpush1.bf16.msra.mxu0 %v347
  %412 = vmatprep.subr.bf16.mxu0 %v367
  %413 = vmatpush1.bf16.msra.mxu0 %v364
  %414 = vmatprep.subr.bf16.mxu0 0
  %415 = vmatpush1.bf16.msra.mxu0 0
  %416 = vmatprep.subr.bf16.mxu0 0
  %417 = vmatpush1.bf16.msra.mxu0 0
  %418 = vmatprep.subr.bf16.mxu0 0
  %419 = vmatpush1.bf16.msra.mxu0 0
  %420 = vmatprep.subr.bf16.mxu0 0
  %421 = vmatpush1.bf16.msra.mxu0 0
  %422 = vmatprep.subr.bf16.mxu0 0
  %423 = vmatpush1.bf16.msra.mxu0 0
  %424 = vmatprep.subr.bf16.mxu0 0
  %425 = vmatpush1.bf16.msra.mxu0 0
  %426 = vmatprep.subr.bf16.mxu0 0
  %427 = vmatpush1.bf16.msra.mxu0 0
  %428 = vmatprep.subr.bf16.mxu0 0
  %429 = vmatpush1.bf16.msra.mxu0 0
  %430 = vmatprep.subr.bf16.mxu0 0
  %431 = vmatpush1.bf16.msra.mxu0 0
  %432 = vmatprep.subr.bf16.mxu0 0
  %433 = vmatpush1.bf16.msra.mxu0 0
  %434 = vmatprep.subr.bf16.mxu0 0
  %435 = vmatpush1.bf16.msra.mxu0 0
  %436 = vmatprep.subr.bf16.mxu0 0
  %437 = vmatpush1.bf16.msra.mxu0 0
  %438 = vmatprep.subr.bf16.mxu0 0
  %439 = vmatpush1.bf16.msra.mxu0 0
  %440 = vmatprep.subr.bf16.mxu0 0
  %441 = vmatpush1.bf16.msra.mxu0 0
  %442 = vmatprep.mubr.bf16.mxu0 0
  %443 = vmatmul.mubr.bf16.gmra.mrb[0].mxu0 %v71
  %v444 = vpop.f32.mrb[0].mxu0
  %v445 = vadd.f32 0.0, %v444
  %v446 = vpop.f32.mrb[0].mxu0
  %v447 = vadd.f32 0.0, %v446
  %v448 = vpop.f32.mrb[0].mxu0
  %v449 = vpop.f32.mrb[0].mxu0
  %450 = vdwg.mxu0
  %v451 = vmax.f32 %v309, %v404
  %v452 = vmax.f32 %v310, %v406
  %v453 = vmax.f32 %v311, %v445
  %v454 = vmax.f32 %v312, %v447
  %v455 = vld [vmem:[%s3] sm:$0xff]
  %v456 = vld [vmem:[%s3 + $0x8] sm:$0xff]
  %v457 = vld [vmem:[%s3 + $0x10] sm:$0xff]
  %v458 = vld [vmem:[%s3 + $0x18] sm:$0xff]
  %v459 = vld [vmem:[%s3 + $0x20] sm:$0xff]
  %v460 = vld [vmem:[%s3 + $0x28] sm:$0xff]
  %v461 = vld [vmem:[%s3 + $0x30] sm:$0x11]
  %v462 = vld [vmem:[%s3 + $0x38] sm:$0x11]
  %v471 = vunpack.c.l.b16 %v455
  %v472 = vunpack.c.h.b16 %v455
  %v473 = vunpack.c.l.b16 %v456
  %v474 = vunpack.c.h.b16 %v456
  %v475 = vunpack.c.l.b16 %v457
  %v476 = vunpack.c.h.b16 %v457
  %v477 = vunpack.c.l.b16 %v458
  %v478 = vunpack.c.h.b16 %v458
  %v479 = vunpack.c.l.b16 %v459
  %v480 = vunpack.c.h.b16 %v459
  %v481 = vunpack.c.l.b16 %v460
  %v482 = vunpack.c.h.b16 %v460
  %v483 = vunpack.c.l.b16 %v461
  %v484 = vunpack.c.h.b16 %v461
  %v485 = vunpack.c.l.b16 %v462
  %v486 = vunpack.c.h.b16 %v462
  %v487 = vpack.c.b16 %v475, %v471
  %v488 = vpack.c.b16 %v476, %v472
  %v489 = vpack.c.b16 %v477, %v473
  %v490 = vpack.c.b16 %v478, %v474
  %v491 = vpack.c.b16 %v483, %v479
  %v492 = vpack.c.b16 %v484, %v480
  %v493 = vpack.c.b16 %v485, %v481
  %v494 = vpack.c.b16 %v486, %v482
  %v500 = vand.u32 %v491, %v76
  %v503 = vand.u32 %v492, %v76
  %v506 = vand.u32 %v493, %v76
  %v509 = vand.u32 %v494, %v76
  %511 = vmatprep.subr.bf16.mxu0 %v488
  %512 = vmatpush1.bf16.msra.mxu0 %v487
  %513 = vmatprep.subr.bf16.mxu0 %v503
  %514 = vmatpush1.bf16.msra.mxu0 %v500
  %515 = vmatprep.subr.bf16.mxu0 0
  %516 = vmatpush1.bf16.msra.mxu0 0
  %517 = vmatprep.subr.bf16.mxu0 0
  %518 = vmatpush1.bf16.msra.mxu0 0
  %519 = vmatprep.subr.bf16.mxu0 0
  %520 = vmatpush1.bf16.msra.mxu0 0
  %521 = vmatprep.subr.bf16.mxu0 0
  %522 = vmatpush1.bf16.msra.mxu0 0
  %523 = vmatprep.subr.bf16.mxu0 0
  %524 = vmatpush1.bf16.msra.mxu0 0
  %525 = vmatprep.subr.bf16.mxu0 0
  %526 = vmatpush1.bf16.msra.mxu0 0
  %527 = vmatprep.subr.bf16.mxu0 0
  %528 = vmatpush1.bf16.msra.mxu0 0
  %529 = vmatprep.subr.bf16.mxu0 0
  %530 = vmatpush1.bf16.msra.mxu0 0
  %531 = vmatprep.subr.bf16.mxu0 0
  %532 = vmatpush1.bf16.msra.mxu0 0
  %533 = vmatprep.subr.bf16.mxu0 0
  %534 = vmatpush1.bf16.msra.mxu0 0
  %535 = vmatprep.subr.bf16.mxu0 0
  %536 = vmatpush1.bf16.msra.mxu0 0
  %537 = vmatprep.subr.bf16.mxu0 0
  %538 = vmatpush1.bf16.msra.mxu0 0
  %539 = vmatprep.subr.bf16.mxu0 0
  %540 = vmatpush1.bf16.msra.mxu0 0
  %541 = vmatprep.subr.bf16.mxu0 0
  %542 = vmatpush1.bf16.msra.mxu0 0
  %543 = vmatprep.mubr.bf16.mxu0 0
  %544 = vmatmul.mubr.bf16.gmra.mrb[0].mxu0 %v71
  %v545 = vpop.f32.mrb[0].mxu0
  %v546 = vadd.f32 0.0, %v545
  %v547 = vpop.f32.mrb[0].mxu0
  %v548 = vadd.f32 0.0, %v547
  %v549 = vpop.f32.mrb[0].mxu0
  %v550 = vpop.f32.mrb[0].mxu0
  %551 = vdwg.mxu0
  %552 = vmatprep.subr.bf16.mxu0 %v490
  %553 = vmatpush1.bf16.msra.mxu0 %v489
  %554 = vmatprep.subr.bf16.mxu0 %v509
  %555 = vmatpush1.bf16.msra.mxu0 %v506
  %556 = vmatprep.subr.bf16.mxu0 0
  %557 = vmatpush1.bf16.msra.mxu0 0
  %558 = vmatprep.subr.bf16.mxu0 0
  %559 = vmatpush1.bf16.msra.mxu0 0
  %560 = vmatprep.subr.bf16.mxu0 0
  %561 = vmatpush1.bf16.msra.mxu0 0
  %562 = vmatprep.subr.bf16.mxu0 0
  %563 = vmatpush1.bf16.msra.mxu0 0
  %564 = vmatprep.subr.bf16.mxu0 0
  %565 = vmatpush1.bf16.msra.mxu0 0
  %566 = vmatprep.subr.bf16.mxu0 0
  %567 = vmatpush1.bf16.msra.mxu0 0
  %568 = vmatprep.subr.bf16.mxu0 0
  %569 = vmatpush1.bf16.msra.mxu0 0
  %570 = vmatprep.subr.bf16.mxu0 0
  %571 = vmatpush1.bf16.msra.mxu0 0
  %572 = vmatprep.subr.bf16.mxu0 0
  %573 = vmatpush1.bf16.msra.mxu0 0
  %574 = vmatprep.subr.bf16.mxu0 0
  %575 = vmatpush1.bf16.msra.mxu0 0
  %576 = vmatprep.subr.bf16.mxu0 0
  %577 = vmatpush1.bf16.msra.mxu0 0
  %578 = vmatprep.subr.bf16.mxu0 0
  %579 = vmatpush1.bf16.msra.mxu0 0
  %580 = vmatprep.subr.bf16.mxu0 0
  %581 = vmatpush1.bf16.msra.mxu0 0
  %582 = vmatprep.subr.bf16.mxu0 0
  %583 = vmatpush1.bf16.msra.mxu0 0
  %584 = vmatprep.mubr.bf16.mxu0 0
  %585 = vmatmul.mubr.bf16.gmra.mrb[0].mxu0 %v71
  %v586 = vpop.f32.mrb[0].mxu0
  %v587 = vadd.f32 0.0, %v586
  %v588 = vpop.f32.mrb[0].mxu0
  %v589 = vadd.f32 0.0, %v588
  %v590 = vpop.f32.mrb[0].mxu0
  %v591 = vpop.f32.mrb[0].mxu0
  %592 = vdwg.mxu0
  %v593 = vmax.f32 %v451, %v546
  %v594 = vmax.f32 %v452, %v548
  %v595 = vmax.f32 %v453, %v587
  %v596 = vmax.f32 %v454, %v589
  %v597 = vld [vmem:[%s5] sm:$0x3f]
  %599 = vset.pattern.permute.xlu0 0
  %600 = vperm.xlu0 %599, %v597
  %v601 = vpop.permute.xlu0 %600
  %v603 = vadd.f32 %v593, %v601
  %v604 = vadd.f32 %v594, %v601
  %v605 = vadd.f32 %v595, %v601
  %v606 = vadd.f32 %v596, %v601
  %v607 = vmax.f32 %v603, 0.0
  %v608 = vmax.f32 %v604, 0.0
  %v609 = vmax.f32 %v605, 0.0
  %v610 = vmax.f32 %v606, 0.0
  %611 = vst [vmem:[%s6] sm:$0x3f] %v607
  %612 = vst [vmem:[%s6 + $0x8] sm:$0x3f] %v608
  %613 = vst [vmem:[%s6 + $0x10] sm:$0x3f] %v609
  %vm614 = vcmask 62464
  %615 = vst.msk [vmem:[%s6 + $0x18] sm:$0x3f] %vm614, %v610
  // Predicated region
  $region26: #{lenet_forward.3} parent=0 // pred_check
    _
  $region27: #{lenet_forward.3} parent=0 // pred_check_branch
    %617 = sbr.rel (0) target = $region29
  $region28: #{lenet_forward.3} parent=0 // pred_region
    _
  $region29: #{lenet_forward.3} parent=0 // pred_fallthru
    _
  // Predicated region
  $region30: #{lenet_forward.3} parent=0 // pred_check
    _
  $region31: #{lenet_forward.3} parent=0 // pred_check_branch
    %619 = sbr.rel (0) target = $region33
  $region32: #{lenet_forward.3} parent=0 // pred_region
    _
  $region33: #{lenet_forward.3} parent=0 // pred_fallthru
    _

// kernel: lenet_forward.4
$region0: #{lenet_forward.4}
  #allocation0 [shape = 'u32[]', space=smem, size = 0x4, offset = 0x4, fixed_abs, tag = 'smem constant byte address 0x4 - core index']
  #allocation1 [shape = 'u32[144,128]{1,0:T(1,128)}', space=vmem, size = 0x12000, scoped, tag = 'internal scratch']
  %s0 = inlined_call_operand.vmem [shape: bf16[150,50], index: 0, kind: input, shape index: {}]
  %s1 = inlined_call_operand.vmem [shape: bf16[150,50], index: 1, kind: input, shape index: {}]
  %s2 = inlined_call_operand.vmem [shape: bf16[150,50], index: 2, kind: input, shape index: {}]
  %s3 = inlined_call_operand.vmem [shape: bf16[150,50], index: 3, kind: input, shape index: {}]
  %s4 = inlined_call_operand.vmem [shape: bf16[16,150], index: 4, kind: input, shape index: {}]
  %s5 = inlined_call_operand.vmem [shape: f32[16,1], index: 5, kind: input, shape index: {}]
  %s6 = inlined_call_operand.vmem [shape: f32[16,50], index: 6, kind: output, shape index: {}]
  %s7 = sld [smem:[#allocation0]]
  $region34: #{lenet_forward.4} parent=0
    _
  %s9 = ssub.s32 1, %s7
  %s10 = scalar_select 0, %s9, %s7
  // Predicated region
  $region2: #{lenet_forward.4} parent=0 // pred_check
    _
  $region3: #{lenet_forward.4} parent=0 // pred_check_branch
    %12 = sbr.rel (0) target = $region5
  $region4: #{lenet_forward.4} parent=0 // pred_region
    _
  $region5: #{lenet_forward.4} parent=0 // pred_fallthru
    _
  // Predicated region
  $region6: #{lenet_forward.4} parent=0 // pred_check
    _
  $region7: #{lenet_forward.4} parent=0 // pred_check_branch
    %14 = sbr.rel (0) target = $region9
  $region8: #{lenet_forward.4} parent=0 // pred_region
    _
  $region9: #{lenet_forward.4} parent=0 // pred_fallthru
    _
  // Predicated region
  $region10: #{lenet_forward.4} parent=0 // pred_check
    _
  $region11: #{lenet_forward.4} parent=0 // pred_check_branch
    %16 = sbr.rel (0) target = $region13
  $region12: #{lenet_forward.4} parent=0 // pred_region
    _
  $region13: #{lenet_forward.4} parent=0 // pred_fallthru
    _
  // Predicated region
  $region14: #{lenet_forward.4} parent=0 // pred_check
    _
  $region15: #{lenet_forward.4} parent=0 // pred_check_branch
    %18 = sbr.rel (0) target = $region17
  $region16: #{lenet_forward.4} parent=0 // pred_region
    _
  $region17: #{lenet_forward.4} parent=0 // pred_fallthru
    _
  // Predicated region
  $region18: #{lenet_forward.4} parent=0 // pred_check
    _
  $region19: #{lenet_forward.4} parent=0 // pred_check_branch
    %20 = sbr.rel (0) target = $region21
  $region20: #{lenet_forward.4} parent=0 // pred_region
    _
  $region21: #{lenet_forward.4} parent=0 // pred_fallthru
    _
  // Predicated region
  $region22: #{lenet_forward.4} parent=0 // pred_check
    _
  $region23: #{lenet_forward.4} parent=0 // pred_check_branch
    %22 = sbr.rel (0) target = $region25
  $region24: #{lenet_forward.4} parent=0 // pred_region
    _
  $region25: #{lenet_forward.4} parent=0 // pred_fallthru
    _
  %v24 = vld [vmem:[%s4] sm:$0xff]
  %v25 = vld [vmem:[%s4 + $0x8] sm:$0xff]
  %v26 = vld [vmem:[%s0] sm:$0xf]
  %v27 = vld [vmem:[%s0 + $0x4] sm:$0xf]
  %v28 = vld [vmem:[%s0 + $0x8] sm:$0xf]
  %v29 = vld [vmem:[%s0 + $0xc] sm:$0xf]
  %v30 = vld [vmem:[%s0 + $0x10] sm:$0xf]
  %v31 = vld [vmem:[%s0 + $0x14] sm:$0xf]
  %v32 = vld [vmem:[%s0 + $0x18] sm:$0xf]
  %v33 = vld [vmem:[%s0 + $0x1c] sm:$0xf]
  %v34 = vld [vmem:[%s0 + $0x20] sm:$0xf]
  %v35 = vld [vmem:[%s0 + $0x24] sm:$0xf]
  %v36 = vld [vmem:[%s0 + $0x28] sm:$0xf]
  %v37 = vld [vmem:[%s0 + $0x2c] sm:$0xf]
  %v38 = vld [vmem:[%s0 + $0x30] sm:$0xf]
  %v39 = vld [vmem:[%s0 + $0x34] sm:$0xf]
  %v40 = vld [vmem:[%s0 + $0x38] sm:$0xf]
  %v41 = vld [vmem:[%s0 + $0x3c] sm:$0xf]
  %v42 = vld [vmem:[%s0 + $0x40] sm:$0xf]
  %v43 = vld [vmem:[%s0 + $0x44] sm:$0xf]
  %v44 = vld [vmem:[%s0 + $0x48] sm:$0x7]
  %v47 = vunpack.c.l.b16 %v24
  %v48 = vunpack.c.h.b16 %v24
  %v49 = vunpack.c.l.b16 %v25
  %v50 = vunpack.c.h.b16 %v25
  %v51 = vpack.c.b16 %v49, %v47
  %v52 = vpack.c.b16 %v50, %v48
  %v73 = vunpack.c.l.b16 %v26
  %v74 = vunpack.c.l.b16 %v27
  %v75 = vunpack.c.l.b16 %v28
  %v76 = vunpack.c.l.b16 %v29
  %v77 = vunpack.c.l.b16 %v30
  %v78 = vunpack.c.l.b16 %v31
  %v79 = vunpack.c.l.b16 %v32
  %v80 = vunpack.c.l.b16 %v33
  %v81 = vunpack.c.l.b16 %v34
  %v82 = vunpack.c.l.b16 %v35
  %v83 = vunpack.c.l.b16 %v36
  %v84 = vunpack.c.l.b16 %v37
  %v85 = vunpack.c.l.b16 %v38
  %v86 = vunpack.c.l.b16 %v39
  %v87 = vunpack.c.l.b16 %v40
  %v88 = vunpack.c.l.b16 %v41
  %v89 = vunpack.c.l.b16 %v42
  %v90 = vunpack.c.l.b16 %v43
  %v91 = vunpack.c.l.b16 %v44
  %v92 = vpack.c.b16 %v74, %v73
  %v93 = vpack.c.b16 %v76, %v75
  %v94 = vpack.c.b16 %v78, %v77
  %v95 = vpack.c.b16 %v80, %v79
  %v96 = vpack.c.b16 %v82, %v81
  %v97 = vpack.c.b16 %v84, %v83
  %v98 = vpack.c.b16 %v86, %v85
  %v99 = vpack.c.b16 %v88, %v87
  %v100 = vpack.c.b16 %v90, %v89
  %v101 = vpack.c.b16 %v91, %v91
  %vm111 = vcmask 179200
  %v113 = vsel %vm111, %v52, 0
  %vm115 = vcmask 1042432
  %v117 = vsel %vm115, %v101, 0
  %119 = vmatprep.subr.bf16.mxu0 0
  %120 = vmatpush1.bf16.msra.mxu0 %v92
  %121 = vmatprep.subr.bf16.mxu0 0
  %122 = vmatpush1.bf16.msra.mxu0 %v93
  %123 = vmatprep.subr.bf16.mxu0 0
  %124 = vmatpush1.bf16.msra.mxu0 %v94
  %125 = vmatprep.subr.bf16.mxu0 0
  %126 = vmatpush1.bf16.msra.mxu0 %v95
  %127 = vmatprep.subr.bf16.mxu0 0
  %128 = vmatpush1.bf16.msra.mxu0 %v96
  %129 = vmatprep.subr.bf16.mxu0 0
  %130 = vmatpush1.bf16.msra.mxu0 %v97
  %131 = vmatprep.subr.bf16.mxu0 0
  %132 = vmatpush1.bf16.msra.mxu0 %v98
  %133 = vmatprep.subr.bf16.mxu0 0
  %134 = vmatpush1.bf16.msra.mxu0 %v99
  %135 = vmatprep.subr.bf16.mxu0 0
  %136 = vmatpush1.bf16.msra.mxu0 %v100
  %137 = vmatprep.subr.bf16.mxu0 0
  %138 = vmatpush1.bf16.msra.mxu0 %v117
  %139 = vmatprep.subr.bf16.mxu0 0
  %140 = vmatpush1.bf16.msra.mxu0 0
  %141 = vmatprep.subr.bf16.mxu0 0
  %142 = vmatpush1.bf16.msra.mxu0 0
  %143 = vmatprep.subr.bf16.mxu0 0
  %144 = vmatpush1.bf16.msra.mxu0 0
  %145 = vmatprep.subr.bf16.mxu0 0
  %146 = vmatpush1.bf16.msra.mxu0 0
  %147 = vmatprep.subr.bf16.mxu0 0
  %148 = vmatpush1.bf16.msra.mxu0 0
  %149 = vmatprep.subr.bf16.mxu0 0
  %150 = vmatpush1.bf16.msra.mxu0 0
  %151 = vmatprep.mubr.bf16.mxu0 %v113
  %152 = vmatmul.mubr.bf16.gmra.mrb[0].mxu0 %v51
  %v153 = vpop.f32.mrb[0].mxu0
  %v154 = vadd.f32 0.0, %v153
  %v155 = vpop.f32.mrb[0].mxu0
  %v156 = vpop.f32.mrb[0].mxu0
  %v157 = vadd.f32 0.0, %v156
  %v158 = vpop.f32.mrb[0].mxu0
  %159 = vdwg.mxu0
  %v160 = vld [vmem:[%s1] sm:$0xf]
  %v161 = vld [vmem:[%s1 + $0x4] sm:$0xf]
  %v162 = vld [vmem:[%s1 + $0x8] sm:$0xf]
  %v163 = vld [vmem:[%s1 + $0xc] sm:$0xf]
  %v164 = vld [vmem:[%s1 + $0x10] sm:$0xf]
  %v165 = vld [vmem:[%s1 + $0x14] sm:$0xf]
  %v166 = vld [vmem:[%s1 + $0x18] sm:$0xf]
  %v167 = vld [vmem:[%s1 + $0x1c] sm:$0xf]
  %v168 = vld [vmem:[%s1 + $0x20] sm:$0xf]
  %v169 = vld [vmem:[%s1 + $0x24] sm:$0xf]
  %v170 = vld [vmem:[%s1 + $0x28] sm:$0xf]
  %v171 = vld [vmem:[%s1 + $0x2c] sm:$0xf]
  %v172 = vld [vmem:[%s1 + $0x30] sm:$0xf]
  %v173 = vld [vmem:[%s1 + $0x34] sm:$0xf]
  %v174 = vld [vmem:[%s1 + $0x38] sm:$0xf]
  %v175 = vld [vmem:[%s1 + $0x3c] sm:$0xf]
  %v176 = vld [vmem:[%s1 + $0x40] sm:$0xf]
  %v177 = vld [vmem:[%s1 + $0x44] sm:$0xf]
  %v178 = vld [vmem:[%s1 + $0x48] sm:$0x7]
  %v198 = vunpack.c.l.b16 %v160
  %v199 = vunpack.c.l.b16 %v161
  %v200 = vunpack.c.l.b16 %v162
  %v201 = vunpack.c.l.b16 %v163
  %v202 = vunpack.c.l.b16 %v164
  %v203 = vunpack.c.l.b16 %v165
  %v204 = vunpack.c.l.b16 %v166
  %v205 = vunpack.c.l.b16 %v167
  %v206 = vunpack.c.l.b16 %v168
  %v207 = vunpack.c.l.b16 %v169
  %v208 = vunpack.c.l.b16 %v170
  %v209 = vunpack.c.l.b16 %v171
  %v210 = vunpack.c.l.b16 %v172
  %v211 = vunpack.c.l.b16 %v173
  %v212 = vunpack.c.l.b16 %v174
  %v213 = vunpack.c.l.b16 %v175
  %v214 = vunpack.c.l.b16 %v176
  %v215 = vunpack.c.l.b16 %v177
  %v216 = vunpack.c.l.b16 %v178
  %v217 = vpack.c.b16 %v199, %v198
  %v218 = vpack.c.b16 %v201, %v200
  %v219 = vpack.c.b16 %v203, %v202
  %v220 = vpack.c.b16 %v205, %v204
  %v221 = vpack.c.b16 %v207, %v206
  %v222 = vpack.c.b16 %v209, %v208
  %v223 = vpack.c.b16 %v211, %v210
  %v224 = vpack.c.b16 %v213, %v212
  %v225 = vpack.c.b16 %v215, %v214
  %v226 = vpack.c.b16 %v216, %v216
  %v237 = vsel %vm115, %v226, 0
  %239 = vmatprep.subr.bf16.mxu0 0
  %240 = vmatpush1.bf16.msra.mxu0 %v217
  %241 = vmatprep.subr.bf16.mxu0 0
  %242 = vmatpush1.bf16.msra.mxu0 %v218
  %243 = vmatprep.subr.bf16.mxu0 0
  %244 = vmatpush1.bf16.msra.mxu0 %v219
  %245 = vmatprep.subr.bf16.mxu0 0
  %246 = vmatpush1.bf16.msra.mxu0 %v220
  %247 = vmatprep.subr.bf16.mxu0 0
  %248 = vmatpush1.bf16.msra.mxu0 %v221
  %249 = vmatprep.subr.bf16.mxu0 0
  %250 = vmatpush1.bf16.msra.mxu0 %v222
  %251 = vmatprep.subr.bf16.mxu0 0
  %252 = vmatpush1.bf16.msra.mxu0 %v223
  %253 = vmatprep.subr.bf16.mxu0 0
  %254 = vmatpush1.bf16.msra.mxu0 %v224
  %255 = vmatprep.subr.bf16.mxu0 0
  %256 = vmatpush1.bf16.msra.mxu0 %v225
  %257 = vmatprep.subr.bf16.mxu0 0
  %258 = vmatpush1.bf16.msra.mxu0 %v237
  %259 = vmatprep.subr.bf16.mxu0 0
  %260 = vmatpush1.bf16.msra.mxu0 0
  %261 = vmatprep.subr.bf16.mxu0 0
  %262 = vmatpush1.bf16.msra.mxu0 0
  %263 = vmatprep.subr.bf16.mxu0 0
  %264 = vmatpush1.bf16.msra.mxu0 0
  %265 = vmatprep.subr.bf16.mxu0 0
  %266 = vmatpush1.bf16.msra.mxu0 0
  %267 = vmatprep.subr.bf16.mxu0 0
  %268 = vmatpush1.bf16.msra.mxu0 0
  %269 = vmatprep.subr.bf16.mxu0 0
  %270 = vmatpush1.bf16.msra.mxu0 0
  %271 = vmatprep.mubr.bf16.mxu0 %v113
  %272 = vmatmul.mubr.bf16.gmra.mrb[0].mxu0 %v51
  %v273 = vpop.f32.mrb[0].mxu0
  %v274 = vadd.f32 0.0, %v273
  %v275 = vpop.f32.mrb[0].mxu0
  %v276 = vpop.f32.mrb[0].mxu0
  %v277 = vadd.f32 0.0, %v276
  %v278 = vpop.f32.mrb[0].mxu0
  %279 = vdwg.mxu0
  %v280 = vmax.f32 %v154, %v274
  %v281 = vmax.f32 %v157, %v277
  %v282 = vld [vmem:[%s2] sm:$0xf]
  %v283 = vld [vmem:[%s2 + $0x4] sm:$0xf]
  %v284 = vld [vmem:[%s2 + $0x8] sm:$0xf]
  %v285 = vld [vmem:[%s2 + $0xc] sm:$0xf]
  %v286 = vld [vmem:[%s2 + $0x10] sm:$0xf]
  %v287 = vld [vmem:[%s2 + $0x14] sm:$0xf]
  %v288 = vld [vmem:[%s2 + $0x18] sm:$0xf]
  %v289 = vld [vmem:[%s2 + $0x1c] sm:$0xf]
  %v290 = vld [vmem:[%s2 + $0x20] sm:$0xf]
  %v291 = vld [vmem:[%s2 + $0x24] sm:$0xf]
  %v292 = vld [vmem:[%s2 + $0x28] sm:$0xf]
  %v293 = vld [vmem:[%s2 + $0x2c] sm:$0xf]
  %v294 = vld [vmem:[%s2 + $0x30] sm:$0xf]
  %v295 = vld [vmem:[%s2 + $0x34] sm:$0xf]
  %v296 = vld [vmem:[%s2 + $0x38] sm:$0xf]
  %v297 = vld [vmem:[%s2 + $0x3c] sm:$0xf]
  %v298 = vld [vmem:[%s2 + $0x40] sm:$0xf]
  %v299 = vld [vmem:[%s2 + $0x44] sm:$0xf]
  %v300 = vld [vmem:[%s2 + $0x48] sm:$0x7]
  %v320 = vunpack.c.l.b16 %v282
  %v321 = vunpack.c.l.b16 %v283
  %v322 = vunpack.c.l.b16 %v284
  %v323 = vunpack.c.l.b16 %v285
  %v324 = vunpack.c.l.b16 %v286
  %v325 = vunpack.c.l.b16 %v287
  %v326 = vunpack.c.l.b16 %v288
  %v327 = vunpack.c.l.b16 %v289
  %v328 = vunpack.c.l.b16 %v290
  %v329 = vunpack.c.l.b16 %v291
  %v330 = vunpack.c.l.b16 %v292
  %v331 = vunpack.c.l.b16 %v293
  %v332 = vunpack.c.l.b16 %v294
  %v333 = vunpack.c.l.b16 %v295
  %v334 = vunpack.c.l.b16 %v296
  %v335 = vunpack.c.l.b16 %v297
  %v336 = vunpack.c.l.b16 %v298
  %v337 = vunpack.c.l.b16 %v299
  %v338 = vunpack.c.l.b16 %v300
  %v339 = vpack.c.b16 %v321, %v320
  %v340 = vpack.c.b16 %v323, %v322
  %v341 = vpack.c.b16 %v325, %v324
  %v342 = vpack.c.b16 %v327, %v326
  %v343 = vpack.c.b16 %v329, %v328
  %v344 = vpack.c.b16 %v331, %v330
  %v345 = vpack.c.b16 %v333, %v332
  %v346 = vpack.c.b16 %v335, %v334
  %v347 = vpack.c.b16 %v337, %v336
  %v348 = vpack.c.b16 %v338, %v338
  %v359 = vsel %vm115, %v348, 0
  %361 = vmatprep.subr.bf16.mxu0 0
  %362 = vmatpush1.bf16.msra.mxu0 %v339
  %363 = vmatprep.subr.bf16.mxu0 0
  %364 = vmatpush1.bf16.msra.mxu0 %v340
  %365 = vmatprep.subr.bf16.mxu0 0
  %366 = vmatpush1.bf16.msra.mxu0 %v341
  %367 = vmatprep.subr.bf16.mxu0 0
  %368 = vmatpush1.bf16.msra.mxu0 %v342
  %369 = vmatprep.subr.bf16.mxu0 0
  %370 = vmatpush1.bf16.msra.mxu0 %v343
  %371 = vmatprep.subr.bf16.mxu0 0
  %372 = vmatpush1.bf16.msra.mxu0 %v344
  %373 = vmatprep.subr.bf16.mxu0 0
  %374 = vmatpush1.bf16.msra.mxu0 %v345
  %375 = vmatprep.subr.bf16.mxu0 0
  %376 = vmatpush1.bf16.msra.mxu0 %v346
  %377 = vmatprep.subr.bf16.mxu0 0
  %378 = vmatpush1.bf16.msra.mxu0 %v347
  %379 = vmatprep.subr.bf16.mxu0 0
  %380 = vmatpush1.bf16.msra.mxu0 %v359
  %381 = vmatprep.subr.bf16.mxu0 0
  %382 = vmatpush1.bf16.msra.mxu0 0
  %383 = vmatprep.subr.bf16.mxu0 0
  %384 = vmatpush1.bf16.msra.mxu0 0
  %385 = vmatprep.subr.bf16.mxu0 0
  %386 = vmatpush1.bf16.msra.mxu0 0
  %387 = vmatprep.subr.bf16.mxu0 0
  %388 = vmatpush1.bf16.msra.mxu0 0
  %389 = vmatprep.subr.bf16.mxu0 0
  %390 = vmatpush1.bf16.msra.mxu0 0
  %391 = vmatprep.subr.bf16.mxu0 0
  %392 = vmatpush1.bf16.msra.mxu0 0
  %393 = vmatprep.mubr.bf16.mxu0 %v113
  %394 = vmatmul.mubr.bf16.gmra.mrb[0].mxu0 %v51
  %v395 = vpop.f32.mrb[0].mxu0
  %v396 = vadd.f32 0.0, %v395
  %v397 = vpop.f32.mrb[0].mxu0
  %v398 = vpop.f32.mrb[0].mxu0
  %v399 = vadd.f32 0.0, %v398
  %v400 = vpop.f32.mrb[0].mxu0
  %401 = vdwg.mxu0
  %v402 = vmax.f32 %v280, %v396
  %v403 = vmax.f32 %v281, %v399
  %v404 = vld [vmem:[%s3] sm:$0xf]
  %v405 = vld [vmem:[%s3 + $0x4] sm:$0xf]
  %v406 = vld [vmem:[%s3 + $0x8] sm:$0xf]
  %v407 = vld [vmem:[%s3 + $0xc] sm:$0xf]
  %v408 = vld [vmem:[%s3 + $0x10] sm:$0xf]
  %v409 = vld [vmem:[%s3 + $0x14] sm:$0xf]
  %v410 = vld [vmem:[%s3 + $0x18] sm:$0xf]
  %v411 = vld [vmem:[%s3 + $0x1c] sm:$0xf]
  %v412 = vld [vmem:[%s3 + $0x20] sm:$0xf]
  %v413 = vld [vmem:[%s3 + $0x24] sm:$0xf]
  %v414 = vld [vmem:[%s3 + $0x28] sm:$0xf]
  %v415 = vld [vmem:[%s3 + $0x2c] sm:$0xf]
  %v416 = vld [vmem:[%s3 + $0x30] sm:$0xf]
  %v417 = vld [vmem:[%s3 + $0x34] sm:$0xf]
  %v418 = vld [vmem:[%s3 + $0x38] sm:$0xf]
  %v419 = vld [vmem:[%s3 + $0x3c] sm:$0xf]
  %v420 = vld [vmem:[%s3 + $0x40] sm:$0xf]
  %v421 = vld [vmem:[%s3 + $0x44] sm:$0xf]
  %v422 = vld [vmem:[%s3 + $0x48] sm:$0x7]
  %v442 = vunpack.c.l.b16 %v404
  %v443 = vunpack.c.l.b16 %v405
  %v444 = vunpack.c.l.b16 %v406
  %v445 = vunpack.c.l.b16 %v407
  %v446 = vunpack.c.l.b16 %v408
  %v447 = vunpack.c.l.b16 %v409
  %v448 = vunpack.c.l.b16 %v410
  %v449 = vunpack.c.l.b16 %v411
  %v450 = vunpack.c.l.b16 %v412
  %v451 = vunpack.c.l.b16 %v413
  %v452 = vunpack.c.l.b16 %v414
  %v453 = vunpack.c.l.b16 %v415
  %v454 = vunpack.c.l.b16 %v416
  %v455 = vunpack.c.l.b16 %v417
  %v456 = vunpack.c.l.b16 %v418
  %v457 = vunpack.c.l.b16 %v419
  %v458 = vunpack.c.l.b16 %v420
  %v459 = vunpack.c.l.b16 %v421
  %v460 = vunpack.c.l.b16 %v422
  %v461 = vpack.c.b16 %v443, %v442
  %v462 = vpack.c.b16 %v445, %v444
  %v463 = vpack.c.b16 %v447, %v446
  %v464 = vpack.c.b16 %v449, %v448
  %v465 = vpack.c.b16 %v451, %v450
  %v466 = vpack.c.b16 %v453, %v452
  %v467 = vpack.c.b16 %v455, %v454
  %v468 = vpack.c.b16 %v457, %v456
  %v469 = vpack.c.b16 %v459, %v458
  %v470 = vpack.c.b16 %v460, %v460
  %v481 = vsel %vm115, %v470, 0
  %483 = vmatprep.subr.bf16.mxu0 0
  %484 = vmatpush1.bf16.msra.mxu0 %v461
  %485 = vmatprep.subr.bf16.mxu0 0
  %486 = vmatpush1.bf16.msra.mxu0 %v462
  %487 = vmatprep.subr.bf16.mxu0 0
  %488 = vmatpush1.bf16.msra.mxu0 %v463
  %489 = vmatprep.subr.bf16.mxu0 0
  %490 = vmatpush1.bf16.msra.mxu0 %v464
  %491 = vmatprep.subr.bf16.mxu0 0
  %492 = vmatpush1.bf16.msra.mxu0 %v465
  %493 = vmatprep.subr.bf16.mxu0 0
  %494 = vmatpush1.bf16.msra.mxu0 %v466
  %495 = vmatprep.subr.bf16.mxu0 0
  %496 = vmatpush1.bf16.msra.mxu0 %v467
  %497 = vmatprep.subr.bf16.mxu0 0
  %498 = vmatpush1.bf16.msra.mxu0 %v468
  %499 = vmatprep.subr.bf16.mxu0 0
  %500 = vmatpush1.bf16.msra.mxu0 %v469
  %501 = vmatprep.subr.bf16.mxu0 0
  %502 = vmatpush1.bf16.msra.mxu0 %v481
  %503 = vmatprep.subr.bf16.mxu0 0
  %504 = vmatpush1.bf16.msra.mxu0 0
  %505 = vmatprep.subr.bf16.mxu0 0
  %506 = vmatpush1.bf16.msra.mxu0 0
  %507 = vmatprep.subr.bf16.mxu0 0
  %508 = vmatpush1.bf16.msra.mxu0 0
  %509 = vmatprep.subr.bf16.mxu0 0
  %510 = vmatpush1.bf16.msra.mxu0 0
  %511 = vmatprep.subr.bf16.mxu0 0
  %512 = vmatpush1.bf16.msra.mxu0 0
  %513 = vmatprep.subr.bf16.mxu0 0
  %514 = vmatpush1.bf16.msra.mxu0 0
  %515 = vmatprep.mubr.bf16.mxu0 %v113
  %516 = vmatmul.mubr.bf16.gmra.mrb[0].mxu0 %v51
  %v517 = vpop.f32.mrb[0].mxu0
  %v518 = vadd.f32 0.0, %v517
  %v519 = vpop.f32.mrb[0].mxu0
  %v520 = vpop.f32.mrb[0].mxu0
  %v521 = vadd.f32 0.0, %v520
  %v522 = vpop.f32.mrb[0].mxu0
  %523 = vdwg.mxu0
  %v524 = vmax.f32 %v402, %v518
  %v525 = vmax.f32 %v403, %v521
  %v526 = vld [vmem:[%s5] sm:$0xff]
  %v527 = vld [vmem:[%s5 + $0x8] sm:$0xff]
  %529 = vset.pattern.permute.xlu0 0
  %530 = vperm.xlu0 %529, %v526
  %v531 = vpop.permute.xlu0 %530
  %534 = vset.pattern.permute.xlu0 0
  %535 = vperm.xlu0 %534, %v527
  %v536 = vpop.permute.xlu0 %535
  %v538 = vadd.f32 %v524, %v531
  %v539 = vadd.f32 %v525, %v536
  %v540 = vmax.f32 %v538, 0.0
  %v541 = vmax.f32 %v539, 0.0
  %vm542 = vcmask 408576
  %543 = vst.msk [vmem:[%s6] sm:$0xff] %vm542, %v540
  %544 = vst.msk [vmem:[%s6 + $0x8] sm:$0xff] %vm542, %v541
  // Predicated region
  $region26: #{lenet_forward.4} parent=0 // pred_check
    _
  $region27: #{lenet_forward.4} parent=0 // pred_check_branch
    %546 = sbr.rel (0) target = $region29
  $region28: #{lenet_forward.4} parent=0 // pred_region
    _
  $region29: #{lenet_forward.4} parent=0 // pred_fallthru
    _
  // Predicated region
  $region30: #{lenet_forward.4} parent=0 // pred_check
    _
  $region31: #{lenet_forward.4} parent=0 // pred_check_branch
    %548 = sbr.rel (0) target = $region33
  $region32: #{lenet_forward.4} parent=0 // pred_region
    _
  $region33: #{lenet_forward.4} parent=0 // pred_fallthru
    _

// kernel: lenet_forward.5
$region0: #{lenet_forward.5}
  #allocation0 [shape = 'u32[]', space=smem, size = 0x4, offset = 0x4, fixed_abs, tag = 'smem constant byte address 0x4 - core index']
  #allocation1 [shape = 'u32[144,128]{1,0:T(1,128)}', space=vmem, size = 0x12000, scoped, tag = 'internal scratch']
  %s0 = inlined_call_operand.vmem [shape: f32[2,400], index: 0, kind: input, shape index: {}]
  %s1 = inlined_call_operand.vmem [shape: f32[400,120], index: 1, kind: input, shape index: {}]
  %s2 = inlined_call_operand.vmem [shape: f32[1,120], index: 2, kind: input, shape index: {}]
  %s3 = inlined_call_operand.vmem [shape: f32[120,84], index: 3, kind: input, shape index: {}]
  %s4 = inlined_call_operand.vmem [shape: f32[1,84], index: 4, kind: input, shape index: {}]
  %s5 = inlined_call_operand.vmem [shape: f32[84,128], index: 5, kind: input, shape index: {}]
  %s6 = inlined_call_operand.vmem [shape: f32[1,128], index: 6, kind: input, shape index: {}]
  %s7 = inlined_call_operand.hbm [shape: f32[2,128], index: 7, kind: output, shape index: {}]
  %s8 = sld [smem:[#allocation0]]
  $region38: #{lenet_forward.5} parent=0
    _
  %s10 = ssub.s32 1, %s8
  %s11 = scalar_select 0, %s10, %s8
  $region1: #{lenet_forward.5} parent=0
    #allocation2 [shape = 'u8[1024]{0}', space=vmem, size = 0x400, scoped, tag = 'output window, operand 0, single buffered']
    #allocation3 [shape = 's32[1]{0}', space=sflag, size = 0x4, scoped, tag = 'scoped memory for lenet_forward.5']
    %12 = vsyncpa [#allocation3], 0
    // Predicated region
    $region2: #{lenet_forward.5} parent=1 // pred_check
      _
    $region3: #{lenet_forward.5} parent=1 // pred_check_branch
      %14 = sbr.rel (0) target = $region5
    $region4: #{lenet_forward.5} parent=1 // pred_region
      _
    $region5: #{lenet_forward.5} parent=1 // pred_fallthru
      _
    // Predicated region
    $region6: #{lenet_forward.5} parent=1 // pred_check
      _
    $region7: #{lenet_forward.5} parent=1 // pred_check_branch
      %16 = sbr.rel (0) target = $region9
    $region8: #{lenet_forward.5} parent=1 // pred_region
      _
    $region9: #{lenet_forward.5} parent=1 // pred_fallthru
      _
    // Predicated region
    $region10: #{lenet_forward.5} parent=1 // pred_check
      _
    $region11: #{lenet_forward.5} parent=1 // pred_check_branch
      %18 = sbr.rel (0) target = $region13
    $region12: #{lenet_forward.5} parent=1 // pred_region
      _
    $region13: #{lenet_forward.5} parent=1 // pred_fallthru
      _
    // Predicated region
    $region14: #{lenet_forward.5} parent=1 // pred_check
      _
    $region15: #{lenet_forward.5} parent=1 // pred_check_branch
      %20 = sbr.rel (0) target = $region17
    $region16: #{lenet_forward.5} parent=1 // pred_region
      _
    $region17: #{lenet_forward.5} parent=1 // pred_fallthru
      _
    // Predicated region
    $region18: #{lenet_forward.5} parent=1 // pred_check
      _
    $region19: #{lenet_forward.5} parent=1 // pred_check_branch
      %22 = sbr.rel (0) target = $region21
    $region20: #{lenet_forward.5} parent=1 // pred_region
      _
    $region21: #{lenet_forward.5} parent=1 // pred_fallthru
      _
    // Predicated region
    $region22: #{lenet_forward.5} parent=1 // pred_check
      _
    $region23: #{lenet_forward.5} parent=1 // pred_check_branch
      %24 = sbr.rel (0) target = $region25
    $region24: #{lenet_forward.5} parent=1 // pred_region
      _
    $region25: #{lenet_forward.5} parent=1 // pred_fallthru
      _
    // Predicated region
    $region26: #{lenet_forward.5} parent=1 // pred_check
      _
    $region27: #{lenet_forward.5} parent=1 // pred_check_branch
      %26 = sbr.rel (0) target = $region29
    $region28: #{lenet_forward.5} parent=1 // pred_region
      _
    $region29: #{lenet_forward.5} parent=1 // pred_fallthru
      _
    %v27 = vld [vmem:[%s0] sm:$0xff]
    %v28 = vld [vmem:[%s1] sm:$0xff]
    %v29 = vld [vmem:[%s1 + $0x8] sm:$0xff]
    %v30 = vld [vmem:[%s1 + $0x10] sm:$0xff]
    %v31 = vld [vmem:[%s1 + $0x18] sm:$0xff]
    %v32 = vld [vmem:[%s1 + $0x20] sm:$0xff]
    %v33 = vld [vmem:[%s1 + $0x28] sm:$0xff]
    %v34 = vld [vmem:[%s1 + $0x30] sm:$0xff]
    %v35 = vld [vmem:[%s1 + $0x38] sm:$0xff]
    %v36 = vld [vmem:[%s1 + $0x40] sm:$0xff]
    %v37 = vld [vmem:[%s1 + $0x48] sm:$0xff]
    %v38 = vld [vmem:[%s1 + $0x50] sm:$0xff]
    %v39 = vld [vmem:[%s1 + $0x58] sm:$0xff]
    %v40 = vld [vmem:[%s1 + $0x60] sm:$0xff]
    %v41 = vld [vmem:[%s1 + $0x68] sm:$0xff]
    %v42 = vld [vmem:[%s1 + $0x70] sm:$0xff]
    %v43 = vld [vmem:[%s1 + $0x78] sm:$0xff]
    %v44 = vld [vmem:[%s1 + $0x80] sm:$0xff]
    %v45 = vld [vmem:[%s1 + $0x88] sm:$0xff]
    %v46 = vld [vmem:[%s1 + $0x90] sm:$0xff]
    %v47 = vld [vmem:[%s1 + $0x98] sm:$0xff]
    %v48 = vld [vmem:[%s1 + $0xa0] sm:$0xff]
    %v49 = vld [vmem:[%s1 + $0xa8] sm:$0xff]
    %v50 = vld [vmem:[%s1 + $0xb0] sm:$0xff]
    %v51 = vld [vmem:[%s1 + $0xb8] sm:$0xff]
    %v52 = vld [vmem:[%s1 + $0xc0] sm:$0xff]
    %v53 = vld [vmem:[%s1 + $0xc8] sm:$0xff]
    %v54 = vld [vmem:[%s1 + $0xd0] sm:$0xff]
    %v55 = vld [vmem:[%s1 + $0xd8] sm:$0xff]
    %v56 = vld [vmem:[%s1 + $0xe0] sm:$0xff]
    %v57 = vld [vmem:[%s1 + $0xe8] sm:$0xff]
    %v58 = vld [vmem:[%s1 + $0xf0] sm:$0xff]
    %v59 = vld [vmem:[%s1 + $0xf8] sm:$0xff]
    %v60 = vld [vmem:[%s1 + $0x100] sm:$0xff]
    %v61 = vld [vmem:[%s1 + $0x108] sm:$0xff]
    %v62 = vld [vmem:[%s1 + $0x110] sm:$0xff]
    %v63 = vld [vmem:[%s1 + $0x118] sm:$0xff]
    %v64 = vld [vmem:[%s1 + $0x120] sm:$0xff]
    %v65 = vld [vmem:[%s1 + $0x128] sm:$0xff]
    %v66 = vld [vmem:[%s1 + $0x130] sm:$0xff]
    %v67 = vld [vmem:[%s1 + $0x138] sm:$0xff]
    %v68 = vld [vmem:[%s1 + $0x140] sm:$0xff]
    %v69 = vld [vmem:[%s1 + $0x148] sm:$0xff]
    %v70 = vld [vmem:[%s1 + $0x150] sm:$0xff]
    %v71 = vld [vmem:[%s1 + $0x158] sm:$0xff]
    %v72 = vld [vmem:[%s1 + $0x160] sm:$0xff]
    %v73 = vld [vmem:[%s1 + $0x168] sm:$0xff]
    %v74 = vld [vmem:[%s1 + $0x170] sm:$0xff]
    %v75 = vld [vmem:[%s1 + $0x178] sm:$0xff]
    %v76 = vld [vmem:[%s1 + $0x180] sm:$0xff]
    %v77 = vld [vmem:[%s1 + $0x188] sm:$0xff]
    %v78 = vld [vmem:[%s2] sm:$0x1]
    %v80 = vlaneseq
    %v81 = vshrl.u32 %v80, 7
    %v82 = vsub.s32 0, %v81
    %v83 = vrot.slane %v78, %v82
    %v86 = vcombine.high %v27, %v27
    %v88 = vunpack.c.l.s4 1983009808
    %v89 = vunpack.c.0.s8 %v88
    %v90 = vlaneseq
    %v91 = vshrl.u32 %v90, 7
    %v92 = vsub.s32 %v89, %v91
    %v93 = vrot.slane %v27, %v92
    %v95 = vunpack.c.l.s4 1983009808
    %v96 = vunpack.c.0.s8 %v95
    %v97 = vlaneseq
    %v98 = vshrl.u32 %v97, 7
    %v99 = vsub.s32 %v96, %v98
    %v100 = vrot.slane %v86, %v99
    %v101 = vcombine.high %v93, %v93
    %v102 = vcombine.high %v100, %v100
    %vm106 = vcmask 130048
    %v107 = vsel %vm106, %v102, 0
    %109 = vmatprep.subr.mxu0 0.0
    %110 = vmatpush1.msra.mxu0 %v28
    %111 = vmatprep.subr.mxu0 0.0
    %112 = vmatpush1.msra.mxu0 %v29
    %113 = vmatprep.subr.mxu0 0.0
    %114 = vmatpush1.msra.mxu0 %v30
    %115 = vmatprep.subr.mxu0 0.0
    %116 = vmatpush1.msra.mxu0 %v31
    %117 = vmatprep.subr.mxu0 0.0
    %118 = vmatpush1.msra.mxu0 %v32
    %119 = vmatprep.subr.mxu0 0.0
    %120 = vmatpush1.msra.mxu0 %v33
    %121 = vmatprep.subr.mxu0 0.0
    %122 = vmatpush1.msra.mxu0 %v34
    %123 = vmatprep.subr.mxu0 0.0
    %124 = vmatpush1.msra.mxu0 %v35
    %125 = vmatprep.subr.mxu0 0.0
    %126 = vmatpush1.msra.mxu0 %v36
    %127 = vmatprep.subr.mxu0 0.0
    %128 = vmatpush1.msra.mxu0 %v37
    %129 = vmatprep.subr.mxu0 0.0
    %130 = vmatpush1.msra.mxu0 %v38
    %131 = vmatprep.subr.mxu0 0.0
    %132 = vmatpush1.msra.mxu0 %v39
    %133 = vmatprep.subr.mxu0 0.0
    %134 = vmatpush1.msra.mxu0 %v40
    %135 = vmatprep.subr.mxu0 0.0
    %136 = vmatpush1.msra.mxu0 %v41
    %137 = vmatprep.subr.mxu0 0.0
    %138 = vmatpush1.msra.mxu0 %v42
    %139 = vmatprep.subr.mxu0 0.0
    %140 = vmatpush1.msra.mxu0 %v43
    %141 = vmatprep.subr.mxu0 0.0
    %142 = vmatpush1.msra.mxu0 %v44
    %143 = vmatprep.subr.mxu0 0.0
    %144 = vmatpush1.msra.mxu0 %v45
    %145 = vmatprep.subr.mxu0 0.0
    %146 = vmatpush1.msra.mxu0 %v46
    %147 = vmatprep.subr.mxu0 0.0
    %148 = vmatpush1.msra.mxu0 %v47
    %149 = vmatprep.subr.mxu0 0.0
    %150 = vmatpush1.msra.mxu0 %v48
    %151 = vmatprep.subr.mxu0 0.0
    %152 = vmatpush1.msra.mxu0 %v49
    %153 = vmatprep.subr.mxu0 0.0
    %154 = vmatpush1.msra.mxu0 %v50
    %155 = vmatprep.subr.mxu0 0.0
    %156 = vmatpush1.msra.mxu0 %v51
    %157 = vmatprep.subr.mxu0 0.0
    %158 = vmatpush1.msra.mxu0 %v52
    %159 = vmatprep.subr.mxu0 0.0
    %160 = vmatpush1.msra.mxu0 %v53
    %161 = vmatprep.subr.mxu0 0.0
    %162 = vmatpush1.msra.mxu0 %v54
    %163 = vmatprep.subr.mxu0 0.0
    %164 = vmatpush1.msra.mxu0 %v55
    %165 = vmatprep.subr.mxu0 0.0
    %166 = vmatpush1.msra.mxu0 %v56
    %167 = vmatprep.subr.mxu0 0.0
    %168 = vmatpush1.msra.mxu0 %v57
    %169 = vmatprep.subr.mxu0 0.0
    %170 = vmatpush1.msra.mxu0 %v58
    %171 = vmatprep.subr.mxu0 0.0
    %172 = vmatpush1.msra.mxu0 %v59
    %173 = vmatprep.mubr.f32.mxu0 %v101
    %174 = vmatmul.mubr.f32.gmra.mrb[0].mxu0 %v93
    %v175 = vpop.f32.mrb[0].mxu0
    %v176 = vadd.f32 %v83, %v175
    %v177 = vpop.f32.mrb[0].mxu0
    %178 = vdwg.mxu0
    %179 = vmatprep.subr.mxu0 0.0
    %180 = vmatpush1.msra.mxu0 %v60
    %181 = vmatprep.subr.mxu0 0.0
    %182 = vmatpush1.msra.mxu0 %v61
    %183 = vmatprep.subr.mxu0 0.0
    %184 = vmatpush1.msra.mxu0 %v62
    %185 = vmatprep.subr.mxu0 0.0
    %186 = vmatpush1.msra.mxu0 %v63
    %187 = vmatprep.subr.mxu0 0.0
    %188 = vmatpush1.msra.mxu0 %v64
    %189 = vmatprep.subr.mxu0 0.0
    %190 = vmatpush1.msra.mxu0 %v65
    %191 = vmatprep.subr.mxu0 0.0
    %192 = vmatpush1.msra.mxu0 %v66
    %193 = vmatprep.subr.mxu0 0.0
    %194 = vmatpush1.msra.mxu0 %v67
    %195 = vmatprep.subr.mxu0 0.0
    %196 = vmatpush1.msra.mxu0 %v68
    %197 = vmatprep.subr.mxu0 0.0
    %198 = vmatpush1.msra.mxu0 %v69
    %199 = vmatprep.subr.mxu0 0.0
    %200 = vmatpush1.msra.mxu0 %v70
    %201 = vmatprep.subr.mxu0 0.0
    %202 = vmatpush1.msra.mxu0 %v71
    %203 = vmatprep.subr.mxu0 0.0
    %204 = vmatpush1.msra.mxu0 %v72
    %205 = vmatprep.subr.mxu0 0.0
    %206 = vmatpush1.msra.mxu0 %v73
    %207 = vmatprep.subr.mxu0 0.0
    %208 = vmatpush1.msra.mxu0 %v74
    %209 = vmatprep.subr.mxu0 0.0
    %210 = vmatpush1.msra.mxu0 %v75
    %211 = vmatprep.subr.mxu0 0.0
    %212 = vmatpush1.msra.mxu0 %v76
    %213 = vmatprep.subr.mxu0 0.0
    %214 = vmatpush1.msra.mxu0 %v77
    %215 = vmatprep.subr.mxu0 0.0
    %216 = vmatpush1.msra.mxu0 0.0
    %217 = vmatprep.subr.mxu0 0.0
    %218 = vmatpush1.msra.mxu0 0.0
    %219 = vmatprep.subr.mxu0 0.0
    %220 = vmatpush1.msra.mxu0 0.0
    %221 = vmatprep.subr.mxu0 0.0
    %222 = vmatpush1.msra.mxu0 0.0
    %223 = vmatprep.subr.mxu0 0.0
    %224 = vmatpush1.msra.mxu0 0.0
    %225 = vmatprep.subr.mxu0 0.0
    %226 = vmatpush1.msra.mxu0 0.0
    %227 = vmatprep.subr.mxu0 0.0
    %228 = vmatpush1.msra.mxu0 0.0
    %229 = vmatprep.subr.mxu0 0.0
    %230 = vmatpush1.msra.mxu0 0.0
    %231 = vmatprep.subr.mxu0 0.0
    %232 = vmatpush1.msra.mxu0 0.0
    %233 = vmatprep.subr.mxu0 0.0
    %234 = vmatpush1.msra.mxu0 0.0
    %235 = vmatprep.subr.mxu0 0.0
    %236 = vmatpush1.msra.mxu0 0.0
    %237 = vmatprep.subr.mxu0 0.0
    %238 = vmatpush1.msra.mxu0 0.0
    %239 = vmatprep.subr.mxu0 0.0
    %240 = vmatpush1.msra.mxu0 0.0
    %241 = vmatprep.subr.mxu0 0.0
    %242 = vmatpush1.msra.mxu0 0.0
    %243 = vmatprep.mubr.f32.mxu0 %v107
    %244 = vmatmul.mubr.f32.gmra.mrb[0].mxu0 %v100
    %v245 = vpop.f32.mrb[0].mxu0
    %v246 = vadd.f32 %v176, %v245
    %v247 = vpop.f32.mrb[0].mxu0
    %248 = vdwg.mxu0
    %v249 = vmax.f32 %v246, 0.0
    %v250 = vld [vmem:[%s3] sm:$0xff]
    %v251 = vld [vmem:[%s3 + $0x8] sm:$0xff]
    %v252 = vld [vmem:[%s3 + $0x10] sm:$0xff]
    %v253 = vld [vmem:[%s3 + $0x18] sm:$0xff]
    %v254 = vld [vmem:[%s3 + $0x20] sm:$0xff]
    %v255 = vld [vmem:[%s3 + $0x28] sm:$0xff]
    %v256 = vld [vmem:[%s3 + $0x30] sm:$0xff]
    %v257 = vld [vmem:[%s3 + $0x38] sm:$0xff]
    %v258 = vld [vmem:[%s3 + $0x40] sm:$0xff]
    %v259 = vld [vmem:[%s3 + $0x48] sm:$0xff]
    %v260 = vld [vmem:[%s3 + $0x50] sm:$0xff]
    %v261 = vld [vmem:[%s3 + $0x58] sm:$0xff]
    %v262 = vld [vmem:[%s3 + $0x60] sm:$0xff]
    %v263 = vld [vmem:[%s3 + $0x68] sm:$0xff]
    %v264 = vld [vmem:[%s3 + $0x70] sm:$0xff]
    %v265 = vld [vmem:[%s4] sm:$0x1]
    %v267 = vlaneseq
    %v268 = vshrl.u32 %v267, 7
    %v269 = vsub.s32 0, %v268
    %v270 = vrot.slane %v265, %v269
    %vm272 = vcmask 982016
    %v274 = vsel %vm272, %v249, 0
    %276 = vmatprep.subr.mxu0 0.0
    %277 = vmatpush1.msra.mxu0 %v250
    %278 = vmatprep.subr.mxu0 0.0
    %279 = vmatpush1.msra.mxu0 %v251
    %280 = vmatprep.subr.mxu0 0.0
    %281 = vmatpush1.msra.mxu0 %v252
    %282 = vmatprep.subr.mxu0 0.0
    %283 = vmatpush1.msra.mxu0 %v253
    %284 = vmatprep.subr.mxu0 0.0
    %285 = vmatpush1.msra.mxu0 %v254
    %286 = vmatprep.subr.mxu0 0.0
    %287 = vmatpush1.msra.mxu0 %v255
    %288 = vmatprep.subr.mxu0 0.0
    %289 = vmatpush1.msra.mxu0 %v256
    %290 = vmatprep.subr.mxu0 0.0
    %291 = vmatpush1.msra.mxu0 %v257
    %292 = vmatprep.subr.mxu0 0.0
    %293 = vmatpush1.msra.mxu0 %v258
    %294 = vmatprep.subr.mxu0 0.0
    %295 = vmatpush1.msra.mxu0 %v259
    %296 = vmatprep.subr.mxu0 0.0
    %297 = vmatpush1.msra.mxu0 %v260
    %298 = vmatprep.subr.mxu0 0.0
    %299 = vmatpush1.msra.mxu0 %v261
    %300 = vmatprep.subr.mxu0 0.0
    %301 = vmatpush1.msra.mxu0 %v262
    %302 = vmatprep.subr.mxu0 0.0
    %303 = vmatpush1.msra.mxu0 %v263
    %304 = vmatprep.subr.mxu0 0.0
    %305 = vmatpush1.msra.mxu0 %v264
    %306 = vmatprep.subr.mxu0 0.0
    %307 = vmatpush1.msra.mxu0 0.0
    %308 = vmatprep.subr.mxu0 0.0
    %309 = vmatpush1.msra.mxu0 0.0
    %310 = vmatprep.subr.mxu0 0.0
    %311 = vmatpush1.msra.mxu0 0.0
    %312 = vmatprep.subr.mxu0 0.0
    %313 = vmatpush1.msra.mxu0 0.0
    %314 = vmatprep.subr.mxu0 0.0
    %315 = vmatpush1.msra.mxu0 0.0
    %316 = vmatprep.subr.mxu0 0.0
    %317 = vmatpush1.msra.mxu0 0.0
    %318 = vmatprep.subr.mxu0 0.0
    %319 = vmatpush1.msra.mxu0 0.0
    %320 = vmatprep.subr.mxu0 0.0
    %321 = vmatpush1.msra.mxu0 0.0
    %322 = vmatprep.subr.mxu0 0.0
    %323 = vmatpush1.msra.mxu0 0.0
    %324 = vmatprep.subr.mxu0 0.0
    %325 = vmatpush1.msra.mxu0 0.0
    %326 = vmatprep.subr.mxu0 0.0
    %327 = vmatpush1.msra.mxu0 0.0
    %328 = vmatprep.subr.mxu0 0.0
    %329 = vmatpush1.msra.mxu0 0.0
    %330 = vmatprep.subr.mxu0 0.0
    %331 = vmatpush1.msra.mxu0 0.0
    %332 = vmatprep.subr.mxu0 0.0
    %333 = vmatpush1.msra.mxu0 0.0
    %334 = vmatprep.subr.mxu0 0.0
    %335 = vmatpush1.msra.mxu0 0.0
    %336 = vmatprep.subr.mxu0 0.0
    %337 = vmatpush1.msra.mxu0 0.0
    %338 = vmatprep.subr.mxu0 0.0
    %339 = vmatpush1.msra.mxu0 0.0
    %340 = vmatprep.mubr.f32.mxu0 0.0
    %341 = vmatmul.mubr.f32.gmra.mrb[0].mxu0 %v274
    %v342 = vpop.f32.mrb[0].mxu0
    %v343 = vadd.f32 %v270, %v342
    %v344 = vpop.f32.mrb[0].mxu0
    %345 = vdwg.mxu0
    %v346 = vmax.f32 %v343, 0.0
    %v347 = vld [vmem:[%s5] sm:$0xff]
    %v348 = vld [vmem:[%s5 + $0x8] sm:$0xff]
    %v349 = vld [vmem:[%s5 + $0x10] sm:$0xff]
    %v350 = vld [vmem:[%s5 + $0x18] sm:$0xff]
    %v351 = vld [vmem:[%s5 + $0x20] sm:$0xff]
    %v352 = vld [vmem:[%s5 + $0x28] sm:$0xff]
    %v353 = vld [vmem:[%s5 + $0x30] sm:$0xff]
    %v354 = vld [vmem:[%s5 + $0x38] sm:$0xff]
    %v355 = vld [vmem:[%s5 + $0x40] sm:$0xff]
    %v356 = vld [vmem:[%s5 + $0x48] sm:$0xff]
    %v357 = vld [vmem:[%s5 + $0x50] sm:$0xf]
    %v358 = vld [vmem:[%s6] sm:$0x1]
    %v360 = vlaneseq
    %v361 = vshrl.u32 %v360, 7
    %v362 = vsub.s32 0, %v361
    %v363 = vrot.slane %v358, %v362
    %vm365 = vcmask 687104
    %v367 = vsel %vm365, %v346, 0
    %vm369 = vcmask 1043456
    %v371 = vsel %vm369, %v357, 0
    %373 = vmatprep.subr.mxu0 0.0
    %374 = vmatpush1.msra.mxu0 %v347
    %375 = vmatprep.subr.mxu0 0.0
    %376 = vmatpush1.msra.mxu0 %v348
    %377 = vmatprep.subr.mxu0 0.0
    %378 = vmatpush1.msra.mxu0 %v349
    %379 = vmatprep.subr.mxu0 0.0
    %380 = vmatpush1.msra.mxu0 %v350
    %381 = vmatprep.subr.mxu0 0.0
    %382 = vmatpush1.msra.mxu0 %v351
    %383 = vmatprep.subr.mxu0 0.0
    %384 = vmatpush1.msra.mxu0 %v352
    %385 = vmatprep.subr.mxu0 0.0
    %386 = vmatpush1.msra.mxu0 %v353
    %387 = vmatprep.subr.mxu0 0.0
    %388 = vmatpush1.msra.mxu0 %v354
    %389 = vmatprep.subr.mxu0 0.0
    %390 = vmatpush1.msra.mxu0 %v355
    %391 = vmatprep.subr.mxu0 0.0
    %392 = vmatpush1.msra.mxu0 %v356
    %393 = vmatprep.subr.mxu0 0.0
    %394 = vmatpush1.msra.mxu0 %v371
    %395 = vmatprep.subr.mxu0 0.0
    %396 = vmatpush1.msra.mxu0 0.0
    %397 = vmatprep.subr.mxu0 0.0
    %398 = vmatpush1.msra.mxu0 0.0
    %399 = vmatprep.subr.mxu0 0.0
    %400 = vmatpush1.msra.mxu0 0.0
    %401 = vmatprep.subr.mxu0 0.0
    %402 = vmatpush1.msra.mxu0 0.0
    %403 = vmatprep.subr.mxu0 0.0
    %404 = vmatpush1.msra.mxu0 0.0
    %405 = vmatprep.subr.mxu0 0.0
    %406 = vmatpush1.msra.mxu0 0.0
    %407 = vmatprep.subr.mxu0 0.0
    %408 = vmatpush1.msra.mxu0 0.0
    %409 = vmatprep.subr.mxu0 0.0
    %410 = vmatpush1.msra.mxu0 0.0
    %411 = vmatprep.subr.mxu0 0.0
    %412 = vmatpush1.msra.mxu0 0.0
    %413 = vmatprep.subr.mxu0 0.0
    %414 = vmatpush1.msra.mxu0 0.0
    %415 = vmatprep.subr.mxu0 0.0
    %416 = vmatpush1.msra.mxu0 0.0
    %417 = vmatprep.subr.mxu0 0.0
    %418 = vmatpush1.msra.mxu0 0.0
    %419 = vmatprep.subr.mxu0 0.0
    %420 = vmatpush1.msra.mxu0 0.0
    %421 = vmatprep.subr.mxu0 0.0
    %422 = vmatpush1.msra.mxu0 0.0
    %423 = vmatprep.subr.mxu0 0.0
    %424 = vmatpush1.msra.mxu0 0.0
    %425 = vmatprep.subr.mxu0 0.0
    %426 = vmatpush1.msra.mxu0 0.0
    %427 = vmatprep.subr.mxu0 0.0
    %428 = vmatpush1.msra.mxu0 0.0
    %429 = vmatprep.subr.mxu0 0.0
    %430 = vmatpush1.msra.mxu0 0.0
    %431 = vmatprep.subr.mxu0 0.0
    %432 = vmatpush1.msra.mxu0 0.0
    %433 = vmatprep.subr.mxu0 0.0
    %434 = vmatpush1.msra.mxu0 0.0
    %435 = vmatprep.subr.mxu0 0.0
    %436 = vmatpush1.msra.mxu0 0.0
    %437 = vmatprep.mubr.f32.mxu0 0.0
    %438 = vmatmul.mubr.f32.gmra.mrb[0].mxu0 %v367
    %v439 = vpop.f32.mrb[0].mxu0
    %v440 = vadd.f32 %v363, %v439
    %v441 = vpop.f32.mrb[0].mxu0
    %442 = vdwg.mxu0
    %443 = vst [vmem:[#allocation2] sm:$0x3] %v440
    // Predicated region
    $region30: #{lenet_forward.5} parent=1 // pred_check
      _
    $region31: #{lenet_forward.5} parent=1 // pred_check_branch
      %445 = sbr.rel (0) target = $region33
    $region32: #{lenet_forward.5} parent=1 // pred_region
      %s447 = ssub.s32 32, 32
      %448 = vsyncadd [#allocation3], %s447
      %s450 = sshll.u32 [#allocation2], 4
      %s451 = int_to_ptr.vmem [resolvable:$true] %s450
      %453 = dma.vmem_to_hbm [thread:$0]  %s451, 32, %s7, [#allocation3]
    $region33: #{lenet_forward.5} parent=1 // pred_fallthru
      _
    // Predicated region
    $region34: #{lenet_forward.5} parent=1 // pred_check
      _
    $region35: #{lenet_forward.5} parent=1 // pred_check_branch
      %455 = sbr.rel (0) target = $region37
    $region36: #{lenet_forward.5} parent=1 // pred_region
      %456 = dma.done [#allocation3], 32
    $region37: #{lenet_forward.5} parent=1 // pred_fallthru
      _
    %457 = vsyncpa [#allocation3], 1

</llo_original>
